<compile_context>
chip_gen: v5e
topology: v5e:2x2
jax: 0.10.0
libtpu: 0.0.40
codegen_flags: <defaults>
</compile_context>

<pallas_src>
import functools

import jax
import jax.numpy as jnp
from jax.experimental import pallas as pl
from jax.experimental.pallas import tpu as pltpu

EPS = 1e-5
INV_SQRT2 = 0.7071067811865476
_SQRT_2_OVER_PI = 0.7978845608028654


def _gelu(x, approx):
    if approx:
        # tanh-approx GELU: tanh runs on the EUP slot (VALU stays free).
        return 0.5 * x * (1.0 + jnp.tanh(_SQRT_2_OVER_PI * (x + 0.044715 * (x * x * x))))
    # PyTorch nn.GELU() default (erf-based, approximate='none').
    return 0.5 * x * (1.0 + jax.lax.erf(x * INV_SQRT2))


def _residual_block2_kernel(x_ref, w1c_ref, w2c_ref, p_ref,
                            S_ref, St_ref, selL_ref, mstart_ref, mlast_ref,
                            o_ref, *, L, Bb, split_taps, approx_gelu):
    # x_ref : (C, T) with T = Bb*L  -- Bb batch elements packed along lanes
    #         (Bb == 1 for the "no repack" path, where the block is (C, L)).
    # w1c_ref, w2c_ref : (C, 2C) fused 2-tap conv weights [w_tap0 | w_tap1].
    # p_ref : (C, 8) packed per-channel params [b1, g1, be1, b2, g2, be2, 0, 0].
    # S_ref (T, Bb) / St_ref (Bb, T) : per-segment sum / broadcast indicators.
    # selL_ref (T, 2*Bb) : selectors extracting x[:, L-1] and x[:, L-2] per segment.
    # mstart_ref / mlast_ref (1, T) int32 : precomputed pos==0 / pos==L-1 masks.
    f32 = jnp.float32
    x = x_ref[...].astype(f32)
    C, T = x.shape
    cdt = w1c_ref.dtype  # matmul operand dtype (f32, or bf16 if wrapper pre-cast weights)

    b1 = p_ref[:, 0:1]
    g1 = p_ref[:, 1:2]
    be1 = p_ref[:, 2:3]
    b2 = p_ref[:, 3:4]
    g2 = p_ref[:, 4:5]
    be2 = p_ref[:, 5:6]

    is_start = mstart_ref[...] != 0          # (1, T) bool, broadcast in selects
    is_last = mlast_ref[...] != 0            # (1, T)

    if Bb > 1:
        S = S_ref[...]                       # (T, Bb)
        St = St_ref[...]                     # (Bb, T)

        def seg_sum(v):                      # (C, T) -> (C, Bb) per-segment sum
            return jnp.dot(v, S, preferred_element_type=f32)

        def seg_bcast(v):                    # (C, Bb) -> (C, T) per-segment bcast
            return jnp.dot(v, St, preferred_element_type=f32)
    else:
        def seg_sum(v):                      # single segment: XLU reduce
            return jnp.sum(v, axis=1, keepdims=True)

        def seg_bcast(v):                    # (C, 1) broadcasts implicitly
            return v

    # ---- conv1 (k=2) on the reflection-padded input ----
    # tap-0 operand A[t] = xpad[t]   = [x1, x0, x1, ..., x_{L-2}]  per segment
    # tap-1 operand       xpad[t+1]  = x[t]                        (t = 0..L-1)
    x_prev = pltpu.roll(x, 1, axis=1)
    x_next = pltpu.roll(x, T - 1, axis=1)
    A = jnp.where(is_start, x_next, x_prev)  # reflection at each segment start

    A_c = A.astype(cdt)                      # cast BEFORE any concatenation
    x_c = x.astype(cdt)

    if split_taps:
        w10 = w1c_ref[:, :C]
        w11 = w1c_ref[:, C:]
        hA = (jnp.dot(w10, A_c, preferred_element_type=f32)
              + jnp.dot(w11, x_c, preferred_element_type=f32) + b1)           # (C, T)
    else:
        w1c = w1c_ref[...]
        hA = jnp.dot(w1c, jnp.concatenate([A_c, x_c], axis=0),
                     preferred_element_type=f32) + b1                          # (C, T)

    # Extra conv1 output column at t == L:  w10 @ x[:,L-1] + w11 @ x[:,L-2] + b1
    if Bb > 1:
        xm = jnp.dot(x, selL_ref[...], preferred_element_type=f32)             # (C, 2*Bb)
        xm1 = xm[:, :Bb]
        xm2 = xm[:, Bb:]
    else:
        xm1 = x[:, L - 1:L]
        xm2 = x[:, L - 2:L - 1]
    if split_taps:
        h_last = (jnp.dot(w10, xm1.astype(cdt), preferred_element_type=f32)
                  + jnp.dot(w11, xm2.astype(cdt), preferred_element_type=f32) + b1)
    else:
        h_last = jnp.dot(
            w1c, jnp.concatenate([xm1.astype(cdt), xm2.astype(cdt)], axis=0),
            preferred_element_type=f32) + b1                                    # (C, Bb)

    # ---- InstanceNorm1d #1 over the L+1 conv1 outputs (single-pass stats) ----
    # TODO(synk): the paired seg_sum([h; h*h]) / seg_bcast([a; c]) matmuls could be
    # fused into one MXU push each (modest win, requires C % 8 == 0 slicing).
    n1 = float(L + 1)
    s1 = seg_sum(hA) + h_last
    q1 = seg_sum(hA * hA) + h_last * h_last
    m1 = s1 / n1
    v1 = jnp.maximum(q1 / n1 - m1 * m1, 0.0)
    a1 = g1 * jax.lax.rsqrt(v1 + EPS)        # fused per-(channel, segment) scale
    c1 = be1 - a1 * m1                       # fused offset

    gA = _gelu(hA * seg_bcast(a1) + seg_bcast(c1), approx_gelu)                 # (C, T)
    g_last = _gelu(h_last * a1 + c1, approx_gelu)                               # (C, Bb)

    # ---- conv2 (k=2): tap-0 = g[t], tap-1 = g[t+1]  (t = 0..L-1) ----
    gB = jnp.where(is_last, seg_bcast(g_last), pltpu.roll(gA, T - 1, axis=1))
    gA_c = gA.astype(cdt)
    gB_c = gB.astype(cdt)
    if split_taps:
        h2 = (jnp.dot(w2c_ref[:, :C], gA_c, preferred_element_type=f32)
              + jnp.dot(w2c_ref[:, C:], gB_c, preferred_element_type=f32) + b2)
    else:
        h2 = jnp.dot(w2c_ref[...], jnp.concatenate([gA_c, gB_c], axis=0),
                     preferred_element_type=f32) + b2                           # (C, T)

    # ---- InstanceNorm1d #2 over the L conv2 outputs, then residual add ----
    n2 = float(L)
    s2 = seg_sum(h2)
    q2 = seg_sum(h2 * h2)
    m2 = s2 / n2
    v2 = jnp.maximum(q2 / n2 - m2 * m2, 0.0)
    a2 = g2 * jax.lax.rsqrt(v2 + EPS)
    c2 = be2 - a2 * m2

    o_ref[...] = (h2 * seg_bcast(a2) + seg_bcast(c2) + x).astype(o_ref.dtype)


# ----------------------------- wrapper helpers -----------------------------

def _vmem_capacity_bytes():
    try:
        info = pltpu.get_tpu_info()
        cap = getattr(info, "vmem_capacity_bytes", None)
        if cap:
            return int(cap)
    except Exception:
        pass
    return 64 * 1024 * 1024   # conservative (v7x-sized) fallback


def _num_tensorcores():
    try:
        info = pltpu.get_tpu_info()
        for name in ("num_tensorcores", "tensorcores_per_chip", "num_cores",
                     "cores_per_chip"):
            v = getattr(info, name, None)
            if isinstance(v, int) and v > 0:
                return v
    except Exception:
        pass
    return 1


def _step_vmem_bytes(C, T, split_taps, itemsize=4):
    act = (16 if split_taps else 24) * C * T * itemsize   # live (C, T) temporaries
    io = 4 * C * T * itemsize                             # double-buffered in/out blocks
    wts = 2 * (2 * C * C) * itemsize                      # single-buffered conv weights
    return act + io + wts


def _legal_bbs(B, L):
    # batch-group sizes whose lane block is legal (full array or 128-aligned)
    return [d for d in range(B, 0, -1)
            if B % d == 0 and (d == B or (d * L) % 128 == 0)]


def _choose_bb(B, L, C, budget, split_taps):
    cands = _legal_bbs(B, L)
    for d in cands:
        if _step_vmem_bytes(C, d * L, split_taps) <= budget:
            return d
    return cands[-1]


def _segment_constants(L, Bb):
    """Grid-invariant masks / indicator matrices, built once in the wrapper."""
    T = Bb * L
    t = jnp.arange(T, dtype=jnp.int32)
    pos = t % L
    seg = t // L
    g = jnp.arange(Bb, dtype=jnp.int32)
    in_seg = seg[:, None] == g[None, :]                               # (T, Bb)
    S = in_seg.astype(jnp.float32)                                    # per-seg sum
    St = jnp.transpose(S)                                             # (Bb, T) bcast
    sel_last = (in_seg & (pos[:, None] == (L - 1))).astype(jnp.float32)
    sel_last2 = (in_seg & (pos[:, None] == (L - 2))).astype(jnp.float32)
    selL = jnp.concatenate([sel_last, sel_last2], axis=1)             # (T, 2*Bb)
    mstart = (pos == 0).astype(jnp.int32)[None, :]                    # (1, T)
    mlast = (pos == (L - 1)).astype(jnp.int32)[None, :]               # (1, T)
    return S, St, selL, mstart, mlast


def _const_spec(shape, buffered):
    zeros = (0,) * len(shape)
    index_map = lambda *_: zeros
    if buffered:
        try:
            # Constant operands never change block -> single buffer is enough.
            return pl.BlockSpec(shape, index_map, pipeline_mode=pl.Buffered(1))
        except TypeError:
            pass
    return pl.BlockSpec(shape, index_map)


def pack_params(raw):
    """raw = (w1 (C,C,2), b1 (C,), g1 (C,), be1 (C,), w2 (C,C,2), b2, g2, be2)."""
    w1, b1, g1, be1, w2, b2, g2, be2 = raw
    w1c = jnp.concatenate([w1[:, :, 0], w1[:, :, 1]], axis=1)   # (C, 2C)
    w2c = jnp.concatenate([w2[:, :, 0], w2[:, :, 1]], axis=1)   # (C, 2C)
    z = jnp.zeros_like(b1)
    pmat = jnp.stack([b1, g1, be1, b2, g2, be2, z, z], axis=1).astype(jnp.float32)
    return (w1c, w2c, pmat)


def residual_block2(x, packed_params, *, use_bf16_matmul=False, approx_gelu=False):
    """x: (B, C, L) float32 (PyTorch NCL layout)."""
    B, C, L = x.shape
    w1c, w2c, pmat = packed_params

    if use_bf16_matmul:  # v6e / v7x MXU fast path (slightly different numerics)
        w1c = w1c.astype(jnp.bfloat16)
        w2c = w2c.astype(jnp.bfloat16)

    cap = _vmem_capacity_bytes()
    split_taps = C >= 256   # big-C: two accumulated dots, no (2C, T) concat
    no_pack = (L % 128 == 0) or (B == 1)

    def run(x_op, bb, grid, x_spec, out_spec, out_shape):
        T = bb * L
        S, St, selL, mstart, mlast = _segment_constants(L, bb)
        kernel = functools.partial(_residual_block2_kernel, L=L, Bb=bb,
                                   split_taps=split_taps, approx_gelu=approx_gelu)
        step_bytes = _step_vmem_bytes(C, T, split_taps)
        cp_kwargs = dict(dimension_semantics=("parallel",))
        if step_bytes > (12 << 20):
            cp_kwargs["vmem_limit_bytes"] = int(
                min(int(0.75 * cap), max(2 * step_bytes, 32 << 20)))
        const_shapes = [(C, 2 * C), (C, 2 * C), (C, 8),
                        (T, bb), (bb, T), (T, 2 * bb), (1, T), (1, T)]
        args = (x_op, w1c, w2c, pmat, S, St, selL, mstart, mlast)

        def build(buffered):
            return pl.pallas_call(
                kernel,
                out_shape=out_shape,
                grid_spec=pltpu.PrefetchScalarGridSpec(
                    num_scalar_prefetch=0,
                    grid=grid,
                    in_specs=[x_spec] + [_const_spec(s, buffered) for s in const_shapes],
                    out_specs=out_spec),
                compiler_params=pltpu.CompilerParams(**cp_kwargs))

        try:
            return build(True)(*args)
        except Exception:  # pl.Buffered(1) unsupported -> default double-buffering
            return build(False)(*args)

    if no_pack:
        # L already lane-dense (or B == 1): grid directly over batch on the
        # (B, C, L) layout -- no (B,C,L) <-> (C,B*L) HBM round trips.
        x_spec = pl.BlockSpec((None, C, L), lambda g: (g, 0, 0))
        out_spec = pl.BlockSpec((None, C, L), lambda g: (g, 0, 0))
        return run(x, 1, (B,), x_spec, out_spec,
                   jax.ShapeDtypeStruct((B, C, L), x.dtype))

    # Packed path (L < 128): channels on sublanes, (batch, time) flattened on lanes.
    bb_budget = max(8 << 20, cap // 4)  # ~32 MiB on 128 MiB chips, ~16 MiB on v7x
    bb = _choose_bb(B, L, C, bb_budget, split_taps)
    ncores = _num_tensorcores()
    if ncores >= 2 and B // bb < ncores:
        for d in _legal_bbs(B, L):
            if B // d >= ncores and _step_vmem_bytes(C, d * L, split_taps) <= bb_budget:
                bb = d
                break
    T = bb * L
    xt = jnp.transpose(x, (1, 0, 2)).reshape(C, B * L)
    x_spec = pl.BlockSpec((C, T), lambda g: (0, g))
    out_spec = pl.BlockSpec((C, T), lambda g: (0, g))
    out2d = run(xt, bb, (B // bb,), x_spec, out_spec,
                jax.ShapeDtypeStruct((C, B * L), x.dtype))
    return out2d.reshape(C, B, L).transpose(1, 0, 2)


# ----------------------------- reference & test -----------------------------

def reference(x, raw):
    # Pure-JAX reference of the PyTorch forward pass.
    w1, b1, g1, be1, w2, b2, g2, be2 = raw
    B, C, L = x.shape
    hi = jax.lax.Precision.HIGHEST
    xp = jnp.concatenate([x[:, :, 1:2], x, x[:, :, L - 2:L - 1]], axis=2)
    h = (jnp.einsum('oi,bit->bot', w1[:, :, 0], xp[:, :, :L + 1], precision=hi)
         + jnp.einsum('oi,bit->bot', w1[:, :, 1], xp[:, :, 1:], precision=hi)
         + b1[None, :, None])
    m = h.mean(axis=2, keepdims=True)
    v = ((h - m) ** 2).mean(axis=2, keepdims=True)
    h = (h - m) * jax.lax.rsqrt(v + EPS) * g1[None, :, None] + be1[None, :, None]
    h = 0.5 * h * (1.0 + jax.lax.erf(h * INV_SQRT2))
    h2 = (jnp.einsum('oi,bit->bot', w2[:, :, 0], h[:, :, :L], precision=hi)
          + jnp.einsum('oi,bit->bot', w2[:, :, 1], h[:, :, 1:], precision=hi)
          + b2[None, :, None])
    m = h2.mean(axis=2, keepdims=True)
    v = ((h2 - m) ** 2).mean(axis=2, keepdims=True)
    h2 = (h2 - m) * jax.lax.rsqrt(v + EPS) * g2[None, :, None] + be2[None, :, None]
    return h2 + x


def init_params(key, C):
    ks = jax.random.split(key, 8)
    s = 0.3
    w1 = s * jax.random.normal(ks[0], (C, C, 2), jnp.float32)   # Conv1d weight (Cout, Cin, k)
    b1 = s * jax.random.normal(ks[1], (C,), jnp.float32)
    w2 = s * jax.random.normal(ks[2], (C, C, 2), jnp.float32)
    b2 = s * jax.random.normal(ks[3], (C,), jnp.float32)
    g1 = 1.0 + 0.1 * jax.random.normal(ks[4], (C,), jnp.float32)
    be1 = 0.1 * jax.random.normal(ks[5], (C,), jnp.float32)
    g2 = 1.0 + 0.1 * jax.random.normal(ks[6], (C,), jnp.float32)
    be2 = 0.1 * jax.random.normal(ks[7], (C,), jnp.float32)
    return (w1, b1, g1, be1, w2, b2, g2, be2)


if __name__ == "__main__":
    key = jax.random.PRNGKey(0)
    kx, kp, kx2 = jax.random.split(key, 3)

    # Packed-lane path (L < 128): B=2, C=8, L=16.
    B, C, L = 2, 8, 16
    x = jax.random.normal(kx, (B, C, L), jnp.float32)
    raw = init_params(kp, C)
    packed = pack_params(raw)

    out = jax.block_until_ready(residual_block2(x, packed))
    ref = jax.block_until_ready(reference(x, raw))
    assert out.shape == (B, C, L), out.shape
    max_err = float(jnp.max(jnp.abs(out - ref)))
    assert max_err < 1e-3, f"packed-path mismatch vs reference: {max_err}"

    # Lane-dense path (L % 128 == 0): no wrapper repack, grid over batch.
    B2, L2 = 2, 128
    x2 = jax.random.normal(kx2, (B2, C, L2), jnp.float32)
    out2 = jax.block_until_ready(residual_block2(x2, packed))
    ref2 = jax.block_until_ready(reference(x2, raw))
    assert out2.shape == (B2, C, L2), out2.shape
    max_err2 = float(jnp.max(jnp.abs(out2 - ref2)))
    assert max_err2 < 1e-3, f"no-pack-path mismatch vs reference: {max_err2}"

    print("KERNEL_OK")
</pallas_src>

<mosaic_0001>
module attributes {stable_mosaic.version = 11 : i64} {
  func.func @_residual_block2_kernel(%arg0: i32, %arg1: memref<8x32xf32, #tpu.memory_space<vmem>>, %arg2: memref<8x16xf32, #tpu.memory_space<vmem>>, %arg3: memref<8x16xf32, #tpu.memory_space<vmem>>, %arg4: memref<8x8xf32, #tpu.memory_space<vmem>>, %arg5: memref<32x2xf32, #tpu.memory_space<vmem>>, %arg6: memref<2x32xf32, #tpu.memory_space<vmem>>, %arg7: memref<32x4xf32, #tpu.memory_space<vmem>>, %arg8: memref<1x32xi32, #tpu.memory_space<vmem>>, %arg9: memref<1x32xi32, #tpu.memory_space<vmem>>, %arg10: memref<8x32xf32, #tpu.memory_space<vmem>>) attributes {dimension_semantics = [#tpu.dimension_semantics<parallel>], iteration_bounds = array<i64: 1>, scalar_prefetch = 0 : i64, scratch_operands = 0 : i64, tpu.core_type = #tpu.core_type<tc>, window_params = [{transform_indices = @transform_0, window_bounds = array<i64: 8, 32>}, {pipeline_mode = #tpu.pipeline_mode<synchronous>, transform_indices = @transform_1, window_bounds = array<i64: 8, 16>}, {pipeline_mode = #tpu.pipeline_mode<synchronous>, transform_indices = @transform_2, window_bounds = array<i64: 8, 16>}, {pipeline_mode = #tpu.pipeline_mode<synchronous>, transform_indices = @transform_3, window_bounds = array<i64: 8, 8>}, {pipeline_mode = #tpu.pipeline_mode<synchronous>, transform_indices = @transform_4, window_bounds = array<i64: 32, 2>}, {pipeline_mode = #tpu.pipeline_mode<synchronous>, transform_indices = @transform_5, window_bounds = array<i64: 2, 32>}, {pipeline_mode = #tpu.pipeline_mode<synchronous>, transform_indices = @transform_6, window_bounds = array<i64: 32, 4>}, {pipeline_mode = #tpu.pipeline_mode<synchronous>, transform_indices = @transform_7, window_bounds = array<i64: 1, 32>}, {pipeline_mode = #tpu.pipeline_mode<synchronous>, transform_indices = @transform_8, window_bounds = array<i64: 1, 32>}, {transform_indices = @transform_9, window_bounds = array<i64: 8, 32>}]} {
    %c0 = arith.constant 0 : index
    %c0_0 = arith.constant 0 : index
    %0 = vector.load %arg1[%c0, %c0_0] : memref<8x32xf32, #tpu.memory_space<vmem>>, vector<8x32xf32>
    %c0_1 = arith.constant 0 : index
    %c0_2 = arith.constant 0 : index
    %1 = vector.load %arg4[%c0_1, %c0_2] : memref<8x8xf32, #tpu.memory_space<vmem>>, vector<8x1xf32>
    %c0_3 = arith.constant 0 : index
    %c1 = arith.constant 1 : index
    %2 = vector.load %arg4[%c0_3, %c1] : memref<8x8xf32, #tpu.memory_space<vmem>>, vector<8x1xf32>
    %c0_4 = arith.constant 0 : index
    %c2 = arith.constant 2 : index
    %3 = vector.load %arg4[%c0_4, %c2] : memref<8x8xf32, #tpu.memory_space<vmem>>, vector<8x1xf32>
    %c0_5 = arith.constant 0 : index
    %c3 = arith.constant 3 : index
    %4 = vector.load %arg4[%c0_5, %c3] : memref<8x8xf32, #tpu.memory_space<vmem>>, vector<8x1xf32>
    %c0_6 = arith.constant 0 : index
    %c4 = arith.constant 4 : index
    %5 = vector.load %arg4[%c0_6, %c4] : memref<8x8xf32, #tpu.memory_space<vmem>>, vector<8x1xf32>
    %c0_7 = arith.constant 0 : index
    %c5 = arith.constant 5 : index
    %6 = vector.load %arg4[%c0_7, %c5] : memref<8x8xf32, #tpu.memory_space<vmem>>, vector<8x1xf32>
    %c0_8 = arith.constant 0 : index
    %c0_9 = arith.constant 0 : index
    %7 = vector.load %arg8[%c0_8, %c0_9] : memref<1x32xi32, #tpu.memory_space<vmem>>, vector<1x32xi32>
    %c0_i32 = arith.constant 0 : i32
    %8 = vector.broadcast %c0_i32 : i32 to vector<1x32xi32>
    %9 = arith.cmpi ne, %7, %8 : vector<1x32xi32>
    %c0_10 = arith.constant 0 : index
    %c0_11 = arith.constant 0 : index
    %10 = vector.load %arg9[%c0_10, %c0_11] : memref<1x32xi32, #tpu.memory_space<vmem>>, vector<1x32xi32>
    %c0_i32_12 = arith.constant 0 : i32
    %11 = vector.broadcast %c0_i32_12 : i32 to vector<1x32xi32>
    %12 = arith.cmpi ne, %10, %11 : vector<1x32xi32>
    %c0_13 = arith.constant 0 : index
    %c0_14 = arith.constant 0 : index
    %13 = vector.load %arg5[%c0_13, %c0_14] : memref<32x2xf32, #tpu.memory_space<vmem>>, vector<32x2xf32>
    %c0_15 = arith.constant 0 : index
    %c0_16 = arith.constant 0 : index
    %14 = vector.load %arg6[%c0_15, %c0_16] : memref<2x32xf32, #tpu.memory_space<vmem>>, vector<2x32xf32>
    %c1_i32 = arith.constant 1 : i32
    %15 = tpu.dynamic_rotate %0 by %c1_i32 dim 1 : vector<8x32xf32>, i32 -> vector<8x32xf32>
    %c31_i32 = arith.constant 31 : i32
    %16 = tpu.dynamic_rotate %0 by %c31_i32 dim 1 : vector<8x32xf32>, i32 -> vector<8x32xf32>
    %17 = vector.shape_cast %9 : vector<1x32xi1> to vector<1x32xi1>
    %18 = vector.broadcast %17 : vector<1x32xi1> to vector<8x32xi1>
    %19 = arith.select %18, %16, %15 : vector<8x32xi1>, vector<8x32xf32>
    %c0_17 = arith.constant 0 : index
    %c0_18 = arith.constant 0 : index
    %20 = vector.load %arg2[%c0_17, %c0_18] : memref<8x16xf32, #tpu.memory_space<vmem>>, vector<8x16xf32>
    %21 = tpu.concatenate %19, %0 in 0 : vector<8x32xf32>, vector<8x32xf32> -> vector<16x32xf32>
    %cst = arith.constant dense<0.000000e+00> : vector<8x32xf32>
    %22 = tpu.matmul %20, %21, %cst {dimension_numbers = #tpu.dot_dimension_numbers<[1], [0], [0], [1], [0, 0, 1, 1], [], []>} : vector<8x16xf32>, vector<16x32xf32>, vector<8x32xf32> -> vector<8x32xf32>
    %23 = vector.broadcast %1 : vector<8x1xf32> to vector<8x32xf32>
    %24 = arith.addf %22, %23 : vector<8x32xf32>
    %c0_19 = arith.constant 0 : index
    %c0_20 = arith.constant 0 : index
    %25 = vector.load %arg7[%c0_19, %c0_20] : memref<32x4xf32, #tpu.memory_space<vmem>>, vector<32x4xf32>
    %cst_21 = arith.constant dense<0.000000e+00> : vector<8x4xf32>
    %26 = tpu.matmul %0, %25, %cst_21 {dimension_numbers = #tpu.dot_dimension_numbers<[1], [0], [0], [1], [0, 0, 1, 1], [], []>} : vector<8x32xf32>, vector<32x4xf32>, vector<8x4xf32> -> vector<8x4xf32>
    %27 = vector.extract_strided_slice %26 {offsets = [0, 0], sizes = [8, 2], strides = [1, 1]} : vector<8x4xf32> to vector<8x2xf32>
    %28 = vector.extract_strided_slice %26 {offsets = [0, 2], sizes = [8, 2], strides = [1, 1]} : vector<8x4xf32> to vector<8x2xf32>
    %29 = tpu.concatenate %27, %28 in 0 : vector<8x2xf32>, vector<8x2xf32> -> vector<16x2xf32>
    %cst_22 = arith.constant dense<0.000000e+00> : vector<8x2xf32>
    %30 = tpu.matmul %20, %29, %cst_22 {dimension_numbers = #tpu.dot_dimension_numbers<[1], [0], [0], [1], [0, 0, 1, 1], [], []>} : vector<8x16xf32>, vector<16x2xf32>, vector<8x2xf32> -> vector<8x2xf32>
    %31 = vector.broadcast %1 : vector<8x1xf32> to vector<8x2xf32>
    %32 = arith.addf %30, %31 : vector<8x2xf32>
    %cst_23 = arith.constant dense<0.000000e+00> : vector<8x2xf32>
    %33 = tpu.matmul %24, %13, %cst_23 {dimension_numbers = #tpu.dot_dimension_numbers<[1], [0], [0], [1], [0, 0, 1, 1], [], []>} : vector<8x32xf32>, vector<32x2xf32>, vector<8x2xf32> -> vector<8x2xf32>
    %34 = arith.addf %33, %32 : vector<8x2xf32>
    %35 = arith.mulf %24, %24 : vector<8x32xf32>
    %cst_24 = arith.constant dense<0.000000e+00> : vector<8x2xf32>
    %36 = tpu.matmul %35, %13, %cst_24 {dimension_numbers = #tpu.dot_dimension_numbers<[1], [0], [0], [1], [0, 0, 1, 1], [], []>} : vector<8x32xf32>, vector<32x2xf32>, vector<8x2xf32> -> vector<8x2xf32>
    %37 = arith.mulf %32, %32 : vector<8x2xf32>
    %38 = arith.addf %36, %37 : vector<8x2xf32>
    %cst_25 = arith.constant 1.700000e+01 : f32
    %39 = vector.broadcast %cst_25 : f32 to vector<8x2xf32>
    %40 = arith.divf %34, %39 : vector<8x2xf32>
    %cst_26 = arith.constant 1.700000e+01 : f32
    %41 = vector.broadcast %cst_26 : f32 to vector<8x2xf32>
    %42 = arith.divf %38, %41 : vector<8x2xf32>
    %43 = arith.mulf %40, %40 : vector<8x2xf32>
    %44 = arith.subf %42, %43 : vector<8x2xf32>
    %cst_27 = arith.constant 0.000000e+00 : f32
    %45 = vector.broadcast %cst_27 : f32 to vector<8x2xf32>
    %46 = arith.maximumf %44, %45 : vector<8x2xf32>
    %cst_28 = arith.constant 9.99999974E-6 : f32
    %47 = vector.broadcast %cst_28 : f32 to vector<8x2xf32>
    %48 = arith.addf %46, %47 : vector<8x2xf32>
    %49 = math.rsqrt %48 : vector<8x2xf32>
    %50 = vector.broadcast %2 : vector<8x1xf32> to vector<8x2xf32>
    %51 = arith.mulf %50, %49 : vector<8x2xf32>
    %52 = arith.mulf %51, %40 : vector<8x2xf32>
    %53 = vector.broadcast %3 : vector<8x1xf32> to vector<8x2xf32>
    %54 = arith.subf %53, %52 : vector<8x2xf32>
    %cst_29 = arith.constant dense<0.000000e+00> : vector<8x32xf32>
    %55 = tpu.matmul %51, %14, %cst_29 {dimension_numbers = #tpu.dot_dimension_numbers<[1], [0], [0], [1], [0, 0, 1, 1], [], []>} : vector<8x2xf32>, vector<2x32xf32>, vector<8x32xf32> -> vector<8x32xf32>
    %56 = arith.mulf %24, %55 : vector<8x32xf32>
    %cst_30 = arith.constant dense<0.000000e+00> : vector<8x32xf32>
    %57 = tpu.matmul %54, %14, %cst_30 {dimension_numbers = #tpu.dot_dimension_numbers<[1], [0], [0], [1], [0, 0, 1, 1], [], []>} : vector<8x2xf32>, vector<2x32xf32>, vector<8x32xf32> -> vector<8x32xf32>
    %58 = arith.addf %56, %57 : vector<8x32xf32>
    %cst_31 = arith.constant 5.000000e-01 : f32
    %59 = vector.broadcast %cst_31 : f32 to vector<8x32xf32>
    %60 = arith.mulf %59, %58 : vector<8x32xf32>
    %cst_32 = arith.constant 0.707106769 : f32
    %61 = vector.broadcast %cst_32 : f32 to vector<8x32xf32>
    %62 = arith.mulf %58, %61 : vector<8x32xf32>
    %63 = math.erf %62 : vector<8x32xf32>
    %cst_33 = arith.constant 1.000000e+00 : f32
    %64 = vector.broadcast %cst_33 : f32 to vector<8x32xf32>
    %65 = arith.addf %64, %63 : vector<8x32xf32>
    %66 = arith.mulf %60, %65 : vector<8x32xf32>
    %67 = arith.mulf %32, %51 : vector<8x2xf32>
    %68 = arith.addf %67, %54 : vector<8x2xf32>
    %cst_34 = arith.constant 5.000000e-01 : f32
    %69 = vector.broadcast %cst_34 : f32 to vector<8x2xf32>
    %70 = arith.mulf %69, %68 : vector<8x2xf32>
    %cst_35 = arith.constant 0.707106769 : f32
    %71 = vector.broadcast %cst_35 : f32 to vector<8x2xf32>
    %72 = arith.mulf %68, %71 : vector<8x2xf32>
    %73 = math.erf %72 : vector<8x2xf32>
    %cst_36 = arith.constant 1.000000e+00 : f32
    %74 = vector.broadcast %cst_36 : f32 to vector<8x2xf32>
    %75 = arith.addf %74, %73 : vector<8x2xf32>
    %76 = arith.mulf %70, %75 : vector<8x2xf32>
    %cst_37 = arith.constant dense<0.000000e+00> : vector<8x32xf32>
    %77 = tpu.matmul %76, %14, %cst_37 {dimension_numbers = #tpu.dot_dimension_numbers<[1], [0], [0], [1], [0, 0, 1, 1], [], []>} : vector<8x2xf32>, vector<2x32xf32>, vector<8x32xf32> -> vector<8x32xf32>
    %c31_i32_38 = arith.constant 31 : i32
    %78 = tpu.dynamic_rotate %66 by %c31_i32_38 dim 1 : vector<8x32xf32>, i32 -> vector<8x32xf32>
    %79 = vector.shape_cast %12 : vector<1x32xi1> to vector<1x32xi1>
    %80 = vector.broadcast %79 : vector<1x32xi1> to vector<8x32xi1>
    %81 = arith.select %80, %77, %78 : vector<8x32xi1>, vector<8x32xf32>
    %c0_39 = arith.constant 0 : index
    %c0_40 = arith.constant 0 : index
    %82 = vector.load %arg3[%c0_39, %c0_40] : memref<8x16xf32, #tpu.memory_space<vmem>>, vector<8x16xf32>
    %83 = tpu.concatenate %66, %81 in 0 : vector<8x32xf32>, vector<8x32xf32> -> vector<16x32xf32>
    %cst_41 = arith.constant dense<0.000000e+00> : vector<8x32xf32>
    %84 = tpu.matmul %82, %83, %cst_41 {dimension_numbers = #tpu.dot_dimension_numbers<[1], [0], [0], [1], [0, 0, 1, 1], [], []>} : vector<8x16xf32>, vector<16x32xf32>, vector<8x32xf32> -> vector<8x32xf32>
    %85 = vector.broadcast %4 : vector<8x1xf32> to vector<8x32xf32>
    %86 = arith.addf %84, %85 : vector<8x32xf32>
    %cst_42 = arith.constant dense<0.000000e+00> : vector<8x2xf32>
    %87 = tpu.matmul %86, %13, %cst_42 {dimension_numbers = #tpu.dot_dimension_numbers<[1], [0], [0], [1], [0, 0, 1, 1], [], []>} : vector<8x32xf32>, vector<32x2xf32>, vector<8x2xf32> -> vector<8x2xf32>
    %88 = arith.mulf %86, %86 : vector<8x32xf32>
    %cst_43 = arith.constant dense<0.000000e+00> : vector<8x2xf32>
    %89 = tpu.matmul %88, %13, %cst_43 {dimension_numbers = #tpu.dot_dimension_numbers<[1], [0], [0], [1], [0, 0, 1, 1], [], []>} : vector<8x32xf32>, vector<32x2xf32>, vector<8x2xf32> -> vector<8x2xf32>
    %cst_44 = arith.constant 1.600000e+01 : f32
    %90 = vector.broadcast %cst_44 : f32 to vector<8x2xf32>
    %91 = arith.divf %87, %90 : vector<8x2xf32>
    %cst_45 = arith.constant 1.600000e+01 : f32
    %92 = vector.broadcast %cst_45 : f32 to vector<8x2xf32>
    %93 = arith.divf %89, %92 : vector<8x2xf32>
    %94 = arith.mulf %91, %91 : vector<8x2xf32>
    %95 = arith.subf %93, %94 : vector<8x2xf32>
    %cst_46 = arith.constant 0.000000e+00 : f32
    %96 = vector.broadcast %cst_46 : f32 to vector<8x2xf32>
    %97 = arith.maximumf %95, %96 : vector<8x2xf32>
    %cst_47 = arith.constant 9.99999974E-6 : f32
    %98 = vector.broadcast %cst_47 : f32 to vector<8x2xf32>
    %99 = arith.addf %97, %98 : vector<8x2xf32>
    %100 = math.rsqrt %99 : vector<8x2xf32>
    %101 = vector.broadcast %5 : vector<8x1xf32> to vector<8x2xf32>
    %102 = arith.mulf %101, %100 : vector<8x2xf32>
    %103 = arith.mulf %102, %91 : vector<8x2xf32>
    %104 = vector.broadcast %6 : vector<8x1xf32> to vector<8x2xf32>
    %105 = arith.subf %104, %103 : vector<8x2xf32>
    %cst_48 = arith.constant dense<0.000000e+00> : vector<8x32xf32>
    %106 = tpu.matmul %102, %14, %cst_48 {dimension_numbers = #tpu.dot_dimension_numbers<[1], [0], [0], [1], [0, 0, 1, 1], [], []>} : vector<8x2xf32>, vector<2x32xf32>, vector<8x32xf32> -> vector<8x32xf32>
    %107 = arith.mulf %86, %106 : vector<8x32xf32>
    %cst_49 = arith.constant dense<0.000000e+00> : vector<8x32xf32>
    %108 = tpu.matmul %105, %14, %cst_49 {dimension_numbers = #tpu.dot_dimension_numbers<[1], [0], [0], [1], [0, 0, 1, 1], [], []>} : vector<8x2xf32>, vector<2x32xf32>, vector<8x32xf32> -> vector<8x32xf32>
    %109 = arith.addf %107, %108 : vector<8x32xf32>
    %110 = arith.addf %109, %0 : vector<8x32xf32>
    %c0_50 = arith.constant 0 : index
    %c0_51 = arith.constant 0 : index
    %111 = vector.load %arg10[%c0_50, %c0_51] : memref<8x32xf32, #tpu.memory_space<vmem>>, vector<8x32xf32>
    tpu.vector_store %arg10[%c0_50, %c0_51], %110 {strides = array<i32>} : memref<8x32xf32, #tpu.memory_space<vmem>>, vector<8x32xf32>,
    return
  }
  func.func @transform_0(%arg0: i32) -> (i32, i32) {
    %c0_i32 = arith.constant 0 : i32
    %c0_i32_0 = arith.constant 0 : i32
    return %c0_i32, %arg0 : i32, i32
  }
  func.func @transform_1(%arg0: i32) -> (i32, i32) {
    %c0_i32 = arith.constant 0 : i32
    %c0_i32_0 = arith.constant 0 : i32
    %c0_i32_1 = arith.constant 0 : i32
    return %c0_i32, %c0_i32_0 : i32, i32
  }
  func.func @transform_2(%arg0: i32) -> (i32, i32) {
    %c0_i32 = arith.constant 0 : i32
    %c0_i32_0 = arith.constant 0 : i32
    %c0_i32_1 = arith.constant 0 : i32
    return %c0_i32, %c0_i32_0 : i32, i32
  }
  func.func @transform_3(%arg0: i32) -> (i32, i32) {
    %c0_i32 = arith.constant 0 : i32
    %c0_i32_0 = arith.constant 0 : i32
    %c0_i32_1 = arith.constant 0 : i32
    return %c0_i32, %c0_i32_0 : i32, i32
  }
  func.func @transform_4(%arg0: i32) -> (i32, i32) {
    %c0_i32 = arith.constant 0 : i32
    %c0_i32_0 = arith.constant 0 : i32
    %c0_i32_1 = arith.constant 0 : i32
    return %c0_i32, %c0_i32_0 : i32, i32
  }
  func.func @transform_5(%arg0: i32) -> (i32, i32) {
    %c0_i32 = arith.constant 0 : i32
    %c0_i32_0 = arith.constant 0 : i32
    %c0_i32_1 = arith.constant 0 : i32
    return %c0_i32, %c0_i32_0 : i32, i32
  }
  func.func @transform_6(%arg0: i32) -> (i32, i32) {
    %c0_i32 = arith.constant 0 : i32
    %c0_i32_0 = arith.constant 0 : i32
    %c0_i32_1 = arith.constant 0 : i32
    return %c0_i32, %c0_i32_0 : i32, i32
  }
  func.func @transform_7(%arg0: i32) -> (i32, i32) {
    %c0_i32 = arith.constant 0 : i32
    %c0_i32_0 = arith.constant 0 : i32
    %c0_i32_1 = arith.constant 0 : i32
    return %c0_i32, %c0_i32_0 : i32, i32
  }
  func.func @transform_8(%arg0: i32) -> (i32, i32) {
    %c0_i32 = arith.constant 0 : i32
    %c0_i32_0 = arith.constant 0 : i32
    %c0_i32_1 = arith.constant 0 : i32
    return %c0_i32, %c0_i32_0 : i32, i32
  }
  func.func @transform_9(%arg0: i32) -> (i32, i32) {
    %c0_i32 = arith.constant 0 : i32
    %c0_i32_0 = arith.constant 0 : i32
    return %c0_i32, %arg0 : i32, i32
  }
}

module attributes {stable_mosaic.version = 11 : i64} {
  func.func @_residual_block2_kernel(%arg0: i32, %arg1: memref<8x32xf32, #tpu.memory_space<vmem>>, %arg2: memref<8x16xf32, #tpu.memory_space<vmem>>, %arg3: memref<8x16xf32, #tpu.memory_space<vmem>>, %arg4: memref<8x8xf32, #tpu.memory_space<vmem>>, %arg5: memref<32x2xf32, #tpu.memory_space<vmem>>, %arg6: memref<2x32xf32, #tpu.memory_space<vmem>>, %arg7: memref<32x4xf32, #tpu.memory_space<vmem>>, %arg8: memref<1x32xi32, #tpu.memory_space<vmem>>, %arg9: memref<1x32xi32, #tpu.memory_space<vmem>>, %arg10: memref<8x32xf32, #tpu.memory_space<vmem>>) attributes {dimension_semantics = [#tpu.dimension_semantics<parallel>], iteration_bounds = array<i64: 1>, scalar_prefetch = 0 : i64, scratch_operands = 0 : i64, tpu.core_type = #tpu.core_type<tc>, window_params = [{transform_indices = @transform_0, window_bounds = array<i64: 8, 32>}, {pipeline_mode = #tpu.pipeline_mode<synchronous>, transform_indices = @transform_1, window_bounds = array<i64: 8, 16>}, {pipeline_mode = #tpu.pipeline_mode<synchronous>, transform_indices = @transform_2, window_bounds = array<i64: 8, 16>}, {pipeline_mode = #tpu.pipeline_mode<synchronous>, transform_indices = @transform_3, window_bounds = array<i64: 8, 8>}, {pipeline_mode = #tpu.pipeline_mode<synchronous>, transform_indices = @transform_4, window_bounds = array<i64: 32, 2>}, {pipeline_mode = #tpu.pipeline_mode<synchronous>, transform_indices = @transform_5, window_bounds = array<i64: 2, 32>}, {pipeline_mode = #tpu.pipeline_mode<synchronous>, transform_indices = @transform_6, window_bounds = array<i64: 32, 4>}, {pipeline_mode = #tpu.pipeline_mode<synchronous>, transform_indices = @transform_7, window_bounds = array<i64: 1, 32>}, {pipeline_mode = #tpu.pipeline_mode<synchronous>, transform_indices = @transform_8, window_bounds = array<i64: 1, 32>}, {transform_indices = @transform_9, window_bounds = array<i64: 8, 32>}]} {
    %c0 = arith.constant 0 : index
    %c0_0 = arith.constant 0 : index
    %0 = vector.load %arg1[%c0, %c0_0] : memref<8x32xf32, #tpu.memory_space<vmem>>, vector<8x32xf32>
    %c0_1 = arith.constant 0 : index
    %c0_2 = arith.constant 0 : index
    %1 = vector.load %arg4[%c0_1, %c0_2] : memref<8x8xf32, #tpu.memory_space<vmem>>, vector<8x1xf32>
    %c0_3 = arith.constant 0 : index
    %c1 = arith.constant 1 : index
    %2 = vector.load %arg4[%c0_3, %c1] : memref<8x8xf32, #tpu.memory_space<vmem>>, vector<8x1xf32>
    %c0_4 = arith.constant 0 : index
    %c2 = arith.constant 2 : index
    %3 = vector.load %arg4[%c0_4, %c2] : memref<8x8xf32, #tpu.memory_space<vmem>>, vector<8x1xf32>
    %c0_5 = arith.constant 0 : index
    %c3 = arith.constant 3 : index
    %4 = vector.load %arg4[%c0_5, %c3] : memref<8x8xf32, #tpu.memory_space<vmem>>, vector<8x1xf32>
    %c0_6 = arith.constant 0 : index
    %c4 = arith.constant 4 : index
    %5 = vector.load %arg4[%c0_6, %c4] : memref<8x8xf32, #tpu.memory_space<vmem>>, vector<8x1xf32>
    %c0_7 = arith.constant 0 : index
    %c5 = arith.constant 5 : index
    %6 = vector.load %arg4[%c0_7, %c5] : memref<8x8xf32, #tpu.memory_space<vmem>>, vector<8x1xf32>
    %c0_8 = arith.constant 0 : index
    %c0_9 = arith.constant 0 : index
    %7 = vector.load %arg8[%c0_8, %c0_9] : memref<1x32xi32, #tpu.memory_space<vmem>>, vector<1x32xi32>
    %c0_i32 = arith.constant 0 : i32
    %8 = vector.broadcast %c0_i32 : i32 to vector<1x32xi32>
    %9 = arith.cmpi ne, %7, %8 : vector<1x32xi32>
    %c0_10 = arith.constant 0 : index
    %c0_11 = arith.constant 0 : index
    %10 = vector.load %arg9[%c0_10, %c0_11] : memref<1x32xi32, #tpu.memory_space<vmem>>, vector<1x32xi32>
    %c0_i32_12 = arith.constant 0 : i32
    %11 = vector.broadcast %c0_i32_12 : i32 to vector<1x32xi32>
    %12 = arith.cmpi ne, %10, %11 : vector<1x32xi32>
    %c0_13 = arith.constant 0 : index
    %c0_14 = arith.constant 0 : index
    %13 = vector.load %arg5[%c0_13, %c0_14] : memref<32x2xf32, #tpu.memory_space<vmem>>, vector<32x2xf32>
    %c0_15 = arith.constant 0 : index
    %c0_16 = arith.constant 0 : index
    %14 = vector.load %arg6[%c0_15, %c0_16] : memref<2x32xf32, #tpu.memory_space<vmem>>, vector<2x32xf32>
    %c1_i32 = arith.constant 1 : i32
    %15 = tpu.dynamic_rotate %0 by %c1_i32 dim 1 : vector<8x32xf32>, i32 -> vector<8x32xf32>
    %c31_i32 = arith.constant 31 : i32
    %16 = tpu.dynamic_rotate %0 by %c31_i32 dim 1 : vector<8x32xf32>, i32 -> vector<8x32xf32>
    %17 = vector.shape_cast %9 : vector<1x32xi1> to vector<1x32xi1>
    %18 = vector.broadcast %17 : vector<1x32xi1> to vector<8x32xi1>
    %19 = arith.select %18, %16, %15 : vector<8x32xi1>, vector<8x32xf32>
    %c0_17 = arith.constant 0 : index
    %c0_18 = arith.constant 0 : index
    %20 = vector.load %arg2[%c0_17, %c0_18] : memref<8x16xf32, #tpu.memory_space<vmem>>, vector<8x16xf32>
    %21 = tpu.concatenate %19, %0 in 0 : vector<8x32xf32>, vector<8x32xf32> -> vector<16x32xf32>
    %cst = arith.constant dense<0.000000e+00> : vector<8x32xf32>
    %22 = tpu.matmul %20, %21, %cst {dimension_numbers = #tpu.dot_dimension_numbers<[1], [0], [0], [1], [0, 0, 1, 1], [], []>} : vector<8x16xf32>, vector<16x32xf32>, vector<8x32xf32> -> vector<8x32xf32>
    %23 = vector.broadcast %1 : vector<8x1xf32> to vector<8x32xf32>
    %24 = arith.addf %22, %23 : vector<8x32xf32>
    %c0_19 = arith.constant 0 : index
    %c0_20 = arith.constant 0 : index
    %25 = vector.load %arg7[%c0_19, %c0_20] : memref<32x4xf32, #tpu.memory_space<vmem>>, vector<32x4xf32>
    %cst_21 = arith.constant dense<0.000000e+00> : vector<8x4xf32>
    %26 = tpu.matmul %0, %25, %cst_21 {dimension_numbers = #tpu.dot_dimension_numbers<[1], [0], [0], [1], [0, 0, 1, 1], [], []>} : vector<8x32xf32>, vector<32x4xf32>, vector<8x4xf32> -> vector<8x4xf32>
    %27 = vector.extract_strided_slice %26 {offsets = [0, 0], sizes = [8, 2], strides = [1, 1]} : vector<8x4xf32> to vector<8x2xf32>
    %28 = vector.extract_strided_slice %26 {offsets = [0, 2], sizes = [8, 2], strides = [1, 1]} : vector<8x4xf32> to vector<8x2xf32>
    %29 = tpu.concatenate %27, %28 in 0 : vector<8x2xf32>, vector<8x2xf32> -> vector<16x2xf32>
    %cst_22 = arith.constant dense<0.000000e+00> : vector<8x2xf32>
    %30 = tpu.matmul %20, %29, %cst_22 {dimension_numbers = #tpu.dot_dimension_numbers<[1], [0], [0], [1], [0, 0, 1, 1], [], []>} : vector<8x16xf32>, vector<16x2xf32>, vector<8x2xf32> -> vector<8x2xf32>
    %31 = vector.broadcast %1 : vector<8x1xf32> to vector<8x2xf32>
    %32 = arith.addf %30, %31 : vector<8x2xf32>
    %cst_23 = arith.constant dense<0.000000e+00> : vector<8x2xf32>
    %33 = tpu.matmul %24, %13, %cst_23 {dimension_numbers = #tpu.dot_dimension_numbers<[1], [0], [0], [1], [0, 0, 1, 1], [], []>} : vector<8x32xf32>, vector<32x2xf32>, vector<8x2xf32> -> vector<8x2xf32>
    %34 = arith.addf %33, %32 : vector<8x2xf32>
    %35 = arith.mulf %24, %24 : vector<8x32xf32>
    %cst_24 = arith.constant dense<0.000000e+00> : vector<8x2xf32>
    %36 = tpu.matmul %35, %13, %cst_24 {dimension_numbers = #tpu.dot_dimension_numbers<[1], [0], [0], [1], [0, 0, 1, 1], [], []>} : vector<8x32xf32>, vector<32x2xf32>, vector<8x2xf32> -> vector<8x2xf32>
    %37 = arith.mulf %32, %32 : vector<8x2xf32>
    %38 = arith.addf %36, %37 : vector<8x2xf32>
    %cst_25 = arith.constant 1.700000e+01 : f32
    %39 = vector.broadcast %cst_25 : f32 to vector<8x2xf32>
    %40 = arith.divf %34, %39 : vector<8x2xf32>
    %cst_26 = arith.constant 1.700000e+01 : f32
    %41 = vector.broadcast %cst_26 : f32 to vector<8x2xf32>
    %42 = arith.divf %38, %41 : vector<8x2xf32>
    %43 = arith.mulf %40, %40 : vector<8x2xf32>
    %44 = arith.subf %42, %43 : vector<8x2xf32>
    %cst_27 = arith.constant 0.000000e+00 : f32
    %45 = vector.broadcast %cst_27 : f32 to vector<8x2xf32>
    %46 = arith.maximumf %44, %45 : vector<8x2xf32>
    %cst_28 = arith.constant 9.99999974E-6 : f32
    %47 = vector.broadcast %cst_28 : f32 to vector<8x2xf32>
    %48 = arith.addf %46, %47 : vector<8x2xf32>
    %49 = math.rsqrt %48 : vector<8x2xf32>
    %50 = vector.broadcast %2 : vector<8x1xf32> to vector<8x2xf32>
    %51 = arith.mulf %50, %49 : vector<8x2xf32>
    %52 = arith.mulf %51, %40 : vector<8x2xf32>
    %53 = vector.broadcast %3 : vector<8x1xf32> to vector<8x2xf32>
    %54 = arith.subf %53, %52 : vector<8x2xf32>
    %cst_29 = arith.constant dense<0.000000e+00> : vector<8x32xf32>
    %55 = tpu.matmul %51, %14, %cst_29 {dimension_numbers = #tpu.dot_dimension_numbers<[1], [0], [0], [1], [0, 0, 1, 1], [], []>} : vector<8x2xf32>, vector<2x32xf32>, vector<8x32xf32> -> vector<8x32xf32>
    %56 = arith.mulf %24, %55 : vector<8x32xf32>
    %cst_30 = arith.constant dense<0.000000e+00> : vector<8x32xf32>
    %57 = tpu.matmul %54, %14, %cst_30 {dimension_numbers = #tpu.dot_dimension_numbers<[1], [0], [0], [1], [0, 0, 1, 1], [], []>} : vector<8x2xf32>, vector<2x32xf32>, vector<8x32xf32> -> vector<8x32xf32>
    %58 = arith.addf %56, %57 : vector<8x32xf32>
    %cst_31 = arith.constant 5.000000e-01 : f32
    %59 = vector.broadcast %cst_31 : f32 to vector<8x32xf32>
    %60 = arith.mulf %59, %58 : vector<8x32xf32>
    %cst_32 = arith.constant 0.707106769 : f32
    %61 = vector.broadcast %cst_32 : f32 to vector<8x32xf32>
    %62 = arith.mulf %58, %61 : vector<8x32xf32>
    %63 = math.erf %62 : vector<8x32xf32>
    %cst_33 = arith.constant 1.000000e+00 : f32
    %64 = vector.broadcast %cst_33 : f32 to vector<8x32xf32>
    %65 = arith.addf %64, %63 : vector<8x32xf32>
    %66 = arith.mulf %60, %65 : vector<8x32xf32>
    %67 = arith.mulf %32, %51 : vector<8x2xf32>
    %68 = arith.addf %67, %54 : vector<8x2xf32>
    %cst_34 = arith.constant 5.000000e-01 : f32
    %69 = vector.broadcast %cst_34 : f32 to vector<8x2xf32>
    %70 = arith.mulf %69, %68 : vector<8x2xf32>
    %cst_35 = arith.constant 0.707106769 : f32
    %71 = vector.broadcast %cst_35 : f32 to vector<8x2xf32>
    %72 = arith.mulf %68, %71 : vector<8x2xf32>
    %73 = math.erf %72 : vector<8x2xf32>
    %cst_36 = arith.constant 1.000000e+00 : f32
    %74 = vector.broadcast %cst_36 : f32 to vector<8x2xf32>
    %75 = arith.addf %74, %73 : vector<8x2xf32>
    %76 = arith.mulf %70, %75 : vector<8x2xf32>
    %cst_37 = arith.constant dense<0.000000e+00> : vector<8x32xf32>
    %77 = tpu.matmul %76, %14, %cst_37 {dimension_numbers = #tpu.dot_dimension_numbers<[1], [0], [0], [1], [0, 0, 1, 1], [], []>} : vector<8x2xf32>, vector<2x32xf32>, vector<8x32xf32> -> vector<8x32xf32>
    %c31_i32_38 = arith.constant 31 : i32
    %78 = tpu.dynamic_rotate %66 by %c31_i32_38 dim 1 : vector<8x32xf32>, i32 -> vector<8x32xf32>
    %79 = vector.shape_cast %12 : vector<1x32xi1> to vector<1x32xi1>
    %80 = vector.broadcast %79 : vector<1x32xi1> to vector<8x32xi1>
    %81 = arith.select %80, %77, %78 : vector<8x32xi1>, vector<8x32xf32>
    %c0_39 = arith.constant 0 : index
    %c0_40 = arith.constant 0 : index
    %82 = vector.load %arg3[%c0_39, %c0_40] : memref<8x16xf32, #tpu.memory_space<vmem>>, vector<8x16xf32>
    %83 = tpu.concatenate %66, %81 in 0 : vector<8x32xf32>, vector<8x32xf32> -> vector<16x32xf32>
    %cst_41 = arith.constant dense<0.000000e+00> : vector<8x32xf32>
    %84 = tpu.matmul %82, %83, %cst_41 {dimension_numbers = #tpu.dot_dimension_numbers<[1], [0], [0], [1], [0, 0, 1, 1], [], []>} : vector<8x16xf32>, vector<16x32xf32>, vector<8x32xf32> -> vector<8x32xf32>
    %85 = vector.broadcast %4 : vector<8x1xf32> to vector<8x32xf32>
    %86 = arith.addf %84, %85 : vector<8x32xf32>
    %cst_42 = arith.constant dense<0.000000e+00> : vector<8x2xf32>
    %87 = tpu.matmul %86, %13, %cst_42 {dimension_numbers = #tpu.dot_dimension_numbers<[1], [0], [0], [1], [0, 0, 1, 1], [], []>} : vector<8x32xf32>, vector<32x2xf32>, vector<8x2xf32> -> vector<8x2xf32>
    %88 = arith.mulf %86, %86 : vector<8x32xf32>
    %cst_43 = arith.constant dense<0.000000e+00> : vector<8x2xf32>
    %89 = tpu.matmul %88, %13, %cst_43 {dimension_numbers = #tpu.dot_dimension_numbers<[1], [0], [0], [1], [0, 0, 1, 1], [], []>} : vector<8x32xf32>, vector<32x2xf32>, vector<8x2xf32> -> vector<8x2xf32>
    %cst_44 = arith.constant 1.600000e+01 : f32
    %90 = vector.broadcast %cst_44 : f32 to vector<8x2xf32>
    %91 = arith.divf %87, %90 : vector<8x2xf32>
    %cst_45 = arith.constant 1.600000e+01 : f32
    %92 = vector.broadcast %cst_45 : f32 to vector<8x2xf32>
    %93 = arith.divf %89, %92 : vector<8x2xf32>
    %94 = arith.mulf %91, %91 : vector<8x2xf32>
    %95 = arith.subf %93, %94 : vector<8x2xf32>
    %cst_46 = arith.constant 0.000000e+00 : f32
    %96 = vector.broadcast %cst_46 : f32 to vector<8x2xf32>
    %97 = arith.maximumf %95, %96 : vector<8x2xf32>
    %cst_47 = arith.constant 9.99999974E-6 : f32
    %98 = vector.broadcast %cst_47 : f32 to vector<8x2xf32>
    %99 = arith.addf %97, %98 : vector<8x2xf32>
    %100 = math.rsqrt %99 : vector<8x2xf32>
    %101 = vector.broadcast %5 : vector<8x1xf32> to vector<8x2xf32>
    %102 = arith.mulf %101, %100 : vector<8x2xf32>
    %103 = arith.mulf %102, %91 : vector<8x2xf32>
    %104 = vector.broadcast %6 : vector<8x1xf32> to vector<8x2xf32>
    %105 = arith.subf %104, %103 : vector<8x2xf32>
    %cst_48 = arith.constant dense<0.000000e+00> : vector<8x32xf32>
    %106 = tpu.matmul %102, %14, %cst_48 {dimension_numbers = #tpu.dot_dimension_numbers<[1], [0], [0], [1], [0, 0, 1, 1], [], []>} : vector<8x2xf32>, vector<2x32xf32>, vector<8x32xf32> -> vector<8x32xf32>
    %107 = arith.mulf %86, %106 : vector<8x32xf32>
    %cst_49 = arith.constant dense<0.000000e+00> : vector<8x32xf32>
    %108 = tpu.matmul %105, %14, %cst_49 {dimension_numbers = #tpu.dot_dimension_numbers<[1], [0], [0], [1], [0, 0, 1, 1], [], []>} : vector<8x2xf32>, vector<2x32xf32>, vector<8x32xf32> -> vector<8x32xf32>
    %109 = arith.addf %107, %108 : vector<8x32xf32>
    %110 = arith.addf %109, %0 : vector<8x32xf32>
    %c0_50 = arith.constant 0 : index
    %c0_51 = arith.constant 0 : index
    %111 = vector.load %arg10[%c0_50, %c0_51] : memref<8x32xf32, #tpu.memory_space<vmem>>, vector<8x32xf32>
    tpu.vector_store %arg10[%c0_50, %c0_51], %110 {strides = array<i32>} : memref<8x32xf32, #tpu.memory_space<vmem>>, vector<8x32xf32>,
    return
  }
  func.func @transform_0(%arg0: i32) -> (i32, i32) {
    %c0_i32 = arith.constant 0 : i32
    %c0_i32_0 = arith.constant 0 : i32
    return %c0_i32, %arg0 : i32, i32
  }
  func.func @transform_1(%arg0: i32) -> (i32, i32) {
    %c0_i32 = arith.constant 0 : i32
    %c0_i32_0 = arith.constant 0 : i32
    %c0_i32_1 = arith.constant 0 : i32
    return %c0_i32, %c0_i32_0 : i32, i32
  }
  func.func @transform_2(%arg0: i32) -> (i32, i32) {
    %c0_i32 = arith.constant 0 : i32
    %c0_i32_0 = arith.constant 0 : i32
    %c0_i32_1 = arith.constant 0 : i32
    return %c0_i32, %c0_i32_0 : i32, i32
  }
  func.func @transform_3(%arg0: i32) -> (i32, i32) {
    %c0_i32 = arith.constant 0 : i32
    %c0_i32_0 = arith.constant 0 : i32
    %c0_i32_1 = arith.constant 0 : i32
    return %c0_i32, %c0_i32_0 : i32, i32
  }
  func.func @transform_4(%arg0: i32) -> (i32, i32) {
    %c0_i32 = arith.constant 0 : i32
    %c0_i32_0 = arith.constant 0 : i32
    %c0_i32_1 = arith.constant 0 : i32
    return %c0_i32, %c0_i32_0 : i32, i32
  }
  func.func @transform_5(%arg0: i32) -> (i32, i32) {
    %c0_i32 = arith.constant 0 : i32
    %c0_i32_0 = arith.constant 0 : i32
    %c0_i32_1 = arith.constant 0 : i32
    return %c0_i32, %c0_i32_0 : i32, i32
  }
  func.func @transform_6(%arg0: i32) -> (i32, i32) {
    %c0_i32 = arith.constant 0 : i32
    %c0_i32_0 = arith.constant 0 : i32
    %c0_i32_1 = arith.constant 0 : i32
    return %c0_i32, %c0_i32_0 : i32, i32
  }
  func.func @transform_7(%arg0: i32) -> (i32, i32) {
    %c0_i32 = arith.constant 0 : i32
    %c0_i32_0 = arith.constant 0 : i32
    %c0_i32_1 = arith.constant 0 : i32
    return %c0_i32, %c0_i32_0 : i32, i32
  }
  func.func @transform_8(%arg0: i32) -> (i32, i32) {
    %c0_i32 = arith.constant 0 : i32
    %c0_i32_0 = arith.constant 0 : i32
    %c0_i32_1 = arith.constant 0 : i32
    return %c0_i32, %c0_i32_0 : i32, i32
  }
  func.func @transform_9(%arg0: i32) -> (i32, i32) {
    %c0_i32 = arith.constant 0 : i32
    %c0_i32_0 = arith.constant 0 : i32
    return %c0_i32, %arg0 : i32, i32
  }
}

</mosaic_0001>

<llo_original>
// kernel: tpu_custom_call.1
$region0: #{tpu_custom_call.1}
  #allocation0 [shape = 'u32[]', space=smem, size = 0x4, offset = 0x4, fixed_abs, tag = 'smem constant byte address 0x4 - core index']
  #allocation1 [shape = 'u32[72,128]{1,0:T(1,128)}', space=vmem, size = 0x9000, scoped, tag = 'internal scratch']
  %s0 = inlined_call_operand.vmem [shape: f32[8,32], index: 0, kind: input, shape index: {}]
  %s1 = inlined_call_operand.vmem [shape: f32[8,16], index: 1, kind: input, shape index: {}]
  %s2 = inlined_call_operand.vmem [shape: f32[8,16], index: 2, kind: input, shape index: {}]
  %s3 = inlined_call_operand.vmem [shape: f32[8,8], index: 3, kind: input, shape index: {}]
  %s4 = inlined_call_operand.vmem [shape: f32[32,2], index: 4, kind: input, shape index: {}]
  %s5 = inlined_call_operand.vmem [shape: f32[2,32], index: 5, kind: input, shape index: {}]
  %s6 = inlined_call_operand.vmem [shape: f32[32,4], index: 6, kind: input, shape index: {}]
  %s7 = inlined_call_operand.vmem [shape: s32[1,32], index: 7, kind: input, shape index: {}]
  %s8 = inlined_call_operand.vmem [shape: s32[1,32], index: 8, kind: input, shape index: {}]
  %s9 = inlined_call_operand.hbm [shape: f32[8,32], index: 9, kind: output, shape index: {}]
  %s10 = sld [smem:[#allocation0]]
  $region46: #{tpu_custom_call.1} parent=0
    _
  %s12 = ssub.s32 1, %s10
  %s13 = scalar_select 0, %s12, %s10
  $region1: #{tpu_custom_call.1} parent=0
    #allocation2 [shape = 'u8[4096]{0}', space=vmem, size = 0x1000, scoped, tag = 'output window, operand 0, single buffered']
    #allocation3 [shape = 's32[1]{0}', space=sflag, size = 0x4, scoped, tag = 'scoped memory for tpu_custom_call.1']
    %14 = vsyncpa [#allocation3], 0
    // Predicated region
    $region2: #{tpu_custom_call.1} parent=1 // pred_check
      _
    $region3: #{tpu_custom_call.1} parent=1 // pred_check_branch
      %16 = sbr.rel (0) target = $region5
    $region4: #{tpu_custom_call.1} parent=1 // pred_region
      _
    $region5: #{tpu_custom_call.1} parent=1 // pred_fallthru
      _
    // Predicated region
    $region6: #{tpu_custom_call.1} parent=1 // pred_check
      _
    $region7: #{tpu_custom_call.1} parent=1 // pred_check_branch
      %18 = sbr.rel (0) target = $region9
    $region8: #{tpu_custom_call.1} parent=1 // pred_region
      _
    $region9: #{tpu_custom_call.1} parent=1 // pred_fallthru
      _
    // Predicated region
    $region10: #{tpu_custom_call.1} parent=1 // pred_check
      _
    $region11: #{tpu_custom_call.1} parent=1 // pred_check_branch
      %20 = sbr.rel (0) target = $region13
    $region12: #{tpu_custom_call.1} parent=1 // pred_region
      _
    $region13: #{tpu_custom_call.1} parent=1 // pred_fallthru
      _
    // Predicated region
    $region14: #{tpu_custom_call.1} parent=1 // pred_check
      _
    $region15: #{tpu_custom_call.1} parent=1 // pred_check_branch
      %22 = sbr.rel (0) target = $region17
    $region16: #{tpu_custom_call.1} parent=1 // pred_region
      _
    $region17: #{tpu_custom_call.1} parent=1 // pred_fallthru
      _
    // Predicated region
    $region18: #{tpu_custom_call.1} parent=1 // pred_check
      _
    $region19: #{tpu_custom_call.1} parent=1 // pred_check_branch
      %24 = sbr.rel (0) target = $region21
    $region20: #{tpu_custom_call.1} parent=1 // pred_region
      _
    $region21: #{tpu_custom_call.1} parent=1 // pred_fallthru
      _
    // Predicated region
    $region22: #{tpu_custom_call.1} parent=1 // pred_check
      _
    $region23: #{tpu_custom_call.1} parent=1 // pred_check_branch
      %26 = sbr.rel (0) target = $region25
    $region24: #{tpu_custom_call.1} parent=1 // pred_region
      _
    $region25: #{tpu_custom_call.1} parent=1 // pred_fallthru
      _
    // Predicated region
    $region26: #{tpu_custom_call.1} parent=1 // pred_check
      _
    $region27: #{tpu_custom_call.1} parent=1 // pred_check_branch
      %28 = sbr.rel (0) target = $region29
    $region28: #{tpu_custom_call.1} parent=1 // pred_region
      _
    $region29: #{tpu_custom_call.1} parent=1 // pred_fallthru
      _
    // Predicated region
    $region30: #{tpu_custom_call.1} parent=1 // pred_check
      _
    $region31: #{tpu_custom_call.1} parent=1 // pred_check_branch
      %30 = sbr.rel (0) target = $region33
    $region32: #{tpu_custom_call.1} parent=1 // pred_region
      _
    $region33: #{tpu_custom_call.1} parent=1 // pred_fallthru
      _
    // Predicated region
    $region34: #{tpu_custom_call.1} parent=1 // pred_check
      _
    $region35: #{tpu_custom_call.1} parent=1 // pred_check_branch
      %32 = sbr.rel (0) target = $region37
    $region36: #{tpu_custom_call.1} parent=1 // pred_region
      _
    $region37: #{tpu_custom_call.1} parent=1 // pred_fallthru
      _
    %v33 = vld [vmem:[%s0] sm:$0xff]
    %v34 = vld [vmem:[%s3] sm:$0xff]
    %v35 = vld [vmem:[%s7] sm:$0x1]
    %vm36 = vcmp.ne.s32.totalorder %v35, 0
    %v37 = vld [vmem:[%s8] sm:$0x1]
    %vm38 = vcmp.ne.s32.totalorder %v37, 0
    %v39 = vld [vmem:[%s4] sm:$0xff]
    %v40 = vld [vmem:[%s4 + $0x8] sm:$0xff]
    %v41 = vld [vmem:[%s4 + $0x10] sm:$0xff]
    %v42 = vld [vmem:[%s4 + $0x18] sm:$0xff]
    %v43 = vld [vmem:[%s5] sm:$0x3]
    %vm44 = vcmask 1047808
    %45 = vrot.lane.b32.xlu0 %v33, 32
    %v46 = vpop.permute.xlu0 %45
    %v47 = vsel %vm44, %v46, %v33
    %48 = vrot.lane.b32.xlu0 %v47, 32
    %v49 = vpop.permute.xlu0 %48
    %v50 = vsel %vm44, %v49, %v33
    %v51 = vsel %vm36, 1, 0
    %v52 = vperm.slane %v51, 0
    %vm53 = vcmp.eq.s32.totalorder %v52, 1
    %55 = vrot.lane.b32.xlu0 %v50, 127
    %v56 = vpop.permute.xlu0 %55
    %58 = vrot.lane.b32.xlu0 %v50, 97
    %v59 = vpop.permute.xlu0 %58
    %v61 = vsel %vm53, %v56, %v59
    %v62 = vld [vmem:[%s1] sm:$0xff]
    %64 = vset.pattern.permute.xlu0 0
    %65 = vperm.xlu0 %64, %v34
    %v66 = vpop.permute.xlu0 %65
    %vm68 = vcmask 130048
    %v70 = vsel %vm68, %v62, 0
    %72 = vmatpush.msra.mxu0 0.0
    %73 = vmatpush.msra.mxu0 0.0
    %74 = vmatpush.msra.mxu0 0.0
    %75 = vmatpush.msra.mxu0 0.0
    %76 = vmatpush.msra.mxu0 0.0
    %77 = vmatpush.msra.mxu0 0.0
    %78 = vmatpush.msra.mxu0 0.0
    %79 = vmatpush.msra.mxu0 0.0
    %80 = vmatpush.msra.mxu0 0.0
    %81 = vmatpush.msra.mxu0 0.0
    %82 = vmatpush.msra.mxu0 0.0
    %83 = vmatpush.msra.mxu0 0.0
    %84 = vmatpush.msra.mxu0 0.0
    %85 = vmatpush.msra.mxu0 0.0
    %86 = vmatpush.msra.mxu0 %v33
    %87 = vmatpush.msra.mxu0 %v61
    %88 = vmatmul.f32.gmra.mxu0 %v70
    %v89 = vpop.f32.mrf.mxu0
    %v90 = vadd.f32 %v66, %v89
    %91 = vdwg.mxu0
    %v92 = vld [vmem:[%s6] sm:$0xff]
    %v93 = vld [vmem:[%s6 + $0x8] sm:$0xff]
    %v94 = vld [vmem:[%s6 + $0x10] sm:$0xff]
    %v95 = vld [vmem:[%s6 + $0x18] sm:$0xff]
    %vm96 = vcmask 261120
    %v98 = vsel %vm96, %v33, 0
    %100 = vmatpush.msra.mxu0 0.0
    %101 = vmatpush.msra.mxu0 0.0
    %102 = vmatpush.msra.mxu0 0.0
    %103 = vmatpush.msra.mxu0 0.0
    %104 = vmatpush.msra.mxu0 0.0
    %105 = vmatpush.msra.mxu0 0.0
    %106 = vmatpush.msra.mxu0 0.0
    %107 = vmatpush.msra.mxu0 0.0
    %108 = vmatpush.msra.mxu0 0.0
    %109 = vmatpush.msra.mxu0 0.0
    %110 = vmatpush.msra.mxu0 0.0
    %111 = vmatpush.msra.mxu0 0.0
    %112 = vmatpush.msra.mxu0 %v95
    %113 = vmatpush.msra.mxu0 %v94
    %114 = vmatpush.msra.mxu0 %v93
    %115 = vmatpush.msra.mxu0 %v92
    %116 = vmatmul.f32.gmra.mxu0 %v98
    %v117 = vpop.f32.mrf.mxu0
    %v118 = vadd.f32 0.0, %v117
    %119 = vdwg.mxu0
    %121 = vrot.lane.b32.xlu0 %v118, 126
    %v122 = vpop.permute.xlu0 %121
    %124 = vmatpush.msra.mxu0 0.0
    %125 = vmatpush.msra.mxu0 0.0
    %126 = vmatpush.msra.mxu0 0.0
    %127 = vmatpush.msra.mxu0 0.0
    %128 = vmatpush.msra.mxu0 0.0
    %129 = vmatpush.msra.mxu0 0.0
    %130 = vmatpush.msra.mxu0 0.0
    %131 = vmatpush.msra.mxu0 0.0
    %132 = vmatpush.msra.mxu0 0.0
    %133 = vmatpush.msra.mxu0 0.0
    %134 = vmatpush.msra.mxu0 0.0
    %135 = vmatpush.msra.mxu0 0.0
    %136 = vmatpush.msra.mxu0 0.0
    %137 = vmatpush.msra.mxu0 0.0
    %138 = vmatpush.msra.mxu0 %v122
    %139 = vmatpush.msra.mxu0 %v118
    %140 = vmatmul.f32.gmra.mxu0 %v70
    %v141 = vpop.f32.mrf.mxu0
    %v142 = vadd.f32 %v66, %v141
    %143 = vdwg.mxu0
    %v145 = vsel %vm96, %v90, 0
    %147 = vmatpush.msra.mxu0 0.0
    %148 = vmatpush.msra.mxu0 0.0
    %149 = vmatpush.msra.mxu0 0.0
    %150 = vmatpush.msra.mxu0 0.0
    %151 = vmatpush.msra.mxu0 0.0
    %152 = vmatpush.msra.mxu0 0.0
    %153 = vmatpush.msra.mxu0 0.0
    %154 = vmatpush.msra.mxu0 0.0
    %155 = vmatpush.msra.mxu0 0.0
    %156 = vmatpush.msra.mxu0 0.0
    %157 = vmatpush.msra.mxu0 0.0
    %158 = vmatpush.msra.mxu0 0.0
    %159 = vmatpush.msra.mxu0 %v42
    %160 = vmatpush.msra.mxu0 %v41
    %161 = vmatpush.msra.mxu0 %v40
    %162 = vmatpush.msra.mxu0 %v39
    %163 = vmatmul.f32.gmra.mxu0 %v145
    %v164 = vpop.f32.mrf.mxu0
    %v165 = vadd.f32 %v142, %v164
    %166 = vdwg.mxu0
    %v167 = vmul.f32 %v90, %v90
    %v168 = vmul.f32 %v142, %v142
    %v170 = vsel %vm96, %v167, 0
    %172 = vmatpush.msra.mxu0 0.0
    %173 = vmatpush.msra.mxu0 0.0
    %174 = vmatpush.msra.mxu0 0.0
    %175 = vmatpush.msra.mxu0 0.0
    %176 = vmatpush.msra.mxu0 0.0
    %177 = vmatpush.msra.mxu0 0.0
    %178 = vmatpush.msra.mxu0 0.0
    %179 = vmatpush.msra.mxu0 0.0
    %180 = vmatpush.msra.mxu0 0.0
    %181 = vmatpush.msra.mxu0 0.0
    %182 = vmatpush.msra.mxu0 0.0
    %183 = vmatpush.msra.mxu0 0.0
    %184 = vmatpush.msra.mxu0 %v42
    %185 = vmatpush.msra.mxu0 %v41
    %186 = vmatpush.msra.mxu0 %v40
    %187 = vmatpush.msra.mxu0 %v39
    %188 = vmatmul.f32.gmra.mxu0 %v170
    %v189 = vpop.f32.mrf.mxu0
    %v190 = vadd.f32 %v168, %v189
    %191 = vdwg.mxu0
    %v192 = vrcp.pop 17.0
    %v193 = vmul.f32 17.0, %v192
    %v194 = vsub.f32 1.0, %v193
    %v195 = vmul.f32 %v192, %v194
    %v196 = vadd.f32 %v192, %v195
    %vm197 = vweird.f32 %v192
    %v198 = vsel %vm197, %v192, %v196
    %v199 = vmul.f32 %v165, %v198
    %v200 = vmul.f32 %v190, %v198
    %v201 = vmul.f32 %v199, %v199
    %v202 = vsub.f32 %v200, %v201
    %v203 = vmax.f32 %v202, 0.0
    %v204 = vadd.f32 %v203, 1e-05
    %v205 = vrsqrt.pop %v204
    %v206 = vmul.f32 %v205, %v204
    %v207 = vmul.f32 %v206, %v205
    %v208 = vmul.f32 0.5, %v207
    %v209 = vsub.f32 1.5, %v208
    %v210 = vmul.f32 %v205, %v209
    %vm211 = vweird.f32 %v204
    %vm212 = vweird.f32 %v205
    %vm213 = vmor %vm211, %vm212
    %v214 = vsel %vm213, %v205, %v210
    %215 = vset.pattern.permute.xlu0 1
    %216 = vperm.xlu0 %215, %v34
    %v217 = vpop.permute.xlu0 %216
    %v219 = vmul.f32 %v217, %v214
    %v220 = vmul.f32 %v219, %v199
    %221 = vset.pattern.permute.xlu0 2
    %222 = vperm.xlu0 %221, %v34
    %v223 = vpop.permute.xlu0 %222
    %v225 = vsub.f32 %v223, %v220
    %vm226 = vcmask 15360
    %v228 = vsel %vm226, %v219, 0
    %vm230 = vcmask 1041408
    %v232 = vsel %vm230, %v43, 0
    %234 = vmatpush.msra.mxu0 0.0
    %235 = vmatpush.msra.mxu0 0.0
    %236 = vmatpush.msra.mxu0 0.0
    %237 = vmatpush.msra.mxu0 0.0
    %238 = vmatpush.msra.mxu0 0.0
    %239 = vmatpush.msra.mxu0 0.0
    %240 = vmatpush.msra.mxu0 0.0
    %241 = vmatpush.msra.mxu0 0.0
    %242 = vmatpush.msra.mxu0 0.0
    %243 = vmatpush.msra.mxu0 0.0
    %244 = vmatpush.msra.mxu0 0.0
    %245 = vmatpush.msra.mxu0 0.0
    %246 = vmatpush.msra.mxu0 0.0
    %247 = vmatpush.msra.mxu0 0.0
    %248 = vmatpush.msra.mxu0 0.0
    %249 = vmatpush.msra.mxu0 %v232
    %250 = vmatmul.f32.gmra.mxu0 %v228
    %v251 = vpop.f32.mrf.mxu0
    %v252 = vadd.f32 0.0, %v251
    %253 = vdwg.mxu0
    %v254 = vmul.f32 %v90, %v252
    %v256 = vsel %vm226, %v225, 0
    %258 = vmatpush.msra.mxu0 0.0
    %259 = vmatpush.msra.mxu0 0.0
    %260 = vmatpush.msra.mxu0 0.0
    %261 = vmatpush.msra.mxu0 0.0
    %262 = vmatpush.msra.mxu0 0.0
    %263 = vmatpush.msra.mxu0 0.0
    %264 = vmatpush.msra.mxu0 0.0
    %265 = vmatpush.msra.mxu0 0.0
    %266 = vmatpush.msra.mxu0 0.0
    %267 = vmatpush.msra.mxu0 0.0
    %268 = vmatpush.msra.mxu0 0.0
    %269 = vmatpush.msra.mxu0 0.0
    %270 = vmatpush.msra.mxu0 0.0
    %271 = vmatpush.msra.mxu0 0.0
    %272 = vmatpush.msra.mxu0 0.0
    %273 = vmatpush.msra.mxu0 %v232
    %274 = vmatmul.f32.gmra.mxu0 %v256
    %v275 = vpop.f32.mrf.mxu0
    %v276 = vadd.f32 0.0, %v275
    %277 = vdwg.mxu0
    %v278 = vadd.f32 %v254, %v276
    %v279 = vmul.f32 %v278, 0.5
    %v280 = vmul.f32 %v278, 0.70710677
    %v281 = vmul.f32 %v280, %v280
    %v282 = vmin.f32 16.0, %v281
    %v283 = vmul.f32 %v282, 2.1237322e-06
    %v284 = vadd.f32 %v283, 0.00028619796
    %v285 = vmul.f32 %v282, %v284
    %v286 = vadd.f32 %v285, 0.0036580483
    %v287 = vmul.f32 %v282, %v286
    %v288 = vadd.f32 %v287, 0.05243302
    %v289 = vmul.f32 %v282, %v288
    %v290 = vadd.f32 %v289, 0.18741608
    %v291 = vmul.f32 %v282, %v290
    %v292 = vadd.f32 %v291, 1.1283791
    %v293 = vmul.f32 %v280, %v292
    %v294 = vmul.f32 %v282, 3.8918573e-05
    %v295 = vadd.f32 %v294, 0.001143296
    %v296 = vmul.f32 %v282, %v295
    %v297 = vadd.f32 %v296, 0.014752088
    %v298 = vmul.f32 %v282, %v297
    %v299 = vadd.f32 %v298, 0.112945676
    %v300 = vmul.f32 %v282, %v299
    %v301 = vadd.f32 %v300, 0.4994258
    %v302 = vmul.f32 %v282, %v301
    %v303 = vadd.f32 %v302, 1.0
    %v304 = vrcp.pop %v303
    %v305 = vmul.f32 %v303, %v304
    %v306 = vsub.f32 1.0, %v305
    %v307 = vmul.f32 %v304, %v306
    %v308 = vadd.f32 %v304, %v307
    %vm309 = vweird.f32 %v303
    %vm310 = vweird.f32 %v304
    %vm311 = vmor %vm309, %vm310
    %v312 = vsel %vm311, %v304, %v308
    %v313 = vand.u32 2147483647, %v303
    %vm314 = vcmp.eq.f32.partialorder %v313, 8.507059e+37
    %v315 = vand.u32 %v303, 2147483648
    %v316 = vor.u32 1.1754944e-38, %v315
    %v317 = vsel %vm314, %v316, %v312
    %v318 = vmul.f32 %v293, %v317
    %v319 = vmin.f32 %v318, 1.0
    %v320 = vmax.f32 %v319, -1.0
    %v321 = vadd.f32 %v320, 1.0
    %v322 = vmul.f32 %v279, %v321
    %v323 = vmul.f32 %v142, %v219
    %v324 = vadd.f32 %v323, %v225
    %v325 = vmul.f32 %v324, 0.5
    %v326 = vmul.f32 %v324, 0.70710677
    %v327 = vmul.f32 %v326, %v326
    %v328 = vmin.f32 16.0, %v327
    %v329 = vmul.f32 %v328, 2.1237322e-06
    %v330 = vadd.f32 %v329, 0.00028619796
    %v331 = vmul.f32 %v328, %v330
    %v332 = vadd.f32 %v331, 0.0036580483
    %v333 = vmul.f32 %v328, %v332
    %v334 = vadd.f32 %v333, 0.05243302
    %v335 = vmul.f32 %v328, %v334
    %v336 = vadd.f32 %v335, 0.18741608
    %v337 = vmul.f32 %v328, %v336
    %v338 = vadd.f32 %v337, 1.1283791
    %v339 = vmul.f32 %v326, %v338
    %v340 = vmul.f32 %v328, 3.8918573e-05
    %v341 = vadd.f32 %v340, 0.001143296
    %v342 = vmul.f32 %v328, %v341
    %v343 = vadd.f32 %v342, 0.014752088
    %v344 = vmul.f32 %v328, %v343
    %v345 = vadd.f32 %v344, 0.112945676
    %v346 = vmul.f32 %v328, %v345
    %v347 = vadd.f32 %v346, 0.4994258
    %v348 = vmul.f32 %v328, %v347
    %v349 = vadd.f32 %v348, 1.0
    %v350 = vrcp.pop %v349
    %v351 = vmul.f32 %v349, %v350
    %v352 = vsub.f32 1.0, %v351
    %v353 = vmul.f32 %v350, %v352
    %v354 = vadd.f32 %v350, %v353
    %vm355 = vweird.f32 %v349
    %vm356 = vweird.f32 %v350
    %vm357 = vmor %vm355, %vm356
    %v358 = vsel %vm357, %v350, %v354
    %v359 = vand.u32 2147483647, %v349
    %vm360 = vcmp.eq.f32.partialorder %v359, 8.507059e+37
    %v361 = vand.u32 %v349, 2147483648
    %v362 = vor.u32 1.1754944e-38, %v361
    %v363 = vsel %vm360, %v362, %v358
    %v364 = vmul.f32 %v339, %v363
    %v365 = vmin.f32 %v364, 1.0
    %v366 = vmax.f32 %v365, -1.0
    %v367 = vadd.f32 %v366, 1.0
    %v368 = vmul.f32 %v325, %v367
    %v370 = vsel %vm226, %v368, 0
    %372 = vmatpush.msra.mxu0 0.0
    %373 = vmatpush.msra.mxu0 0.0
    %374 = vmatpush.msra.mxu0 0.0
    %375 = vmatpush.msra.mxu0 0.0
    %376 = vmatpush.msra.mxu0 0.0
    %377 = vmatpush.msra.mxu0 0.0
    %378 = vmatpush.msra.mxu0 0.0
    %379 = vmatpush.msra.mxu0 0.0
    %380 = vmatpush.msra.mxu0 0.0
    %381 = vmatpush.msra.mxu0 0.0
    %382 = vmatpush.msra.mxu0 0.0
    %383 = vmatpush.msra.mxu0 0.0
    %384 = vmatpush.msra.mxu0 0.0
    %385 = vmatpush.msra.mxu0 0.0
    %386 = vmatpush.msra.mxu0 0.0
    %387 = vmatpush.msra.mxu0 %v232
    %388 = vmatmul.f32.gmra.mxu0 %v370
    %v389 = vpop.f32.mrf.mxu0
    %v390 = vadd.f32 0.0, %v389
    %391 = vdwg.mxu0
    %392 = vrot.lane.b32.xlu0 %v322, 32
    %v393 = vpop.permute.xlu0 %392
    %v394 = vsel %vm44, %v393, %v322
    %395 = vrot.lane.b32.xlu0 %v394, 32
    %v396 = vpop.permute.xlu0 %395
    %v397 = vsel %vm44, %v396, %v322
    %v398 = vsel %vm38, 1, 0
    %v399 = vperm.slane %v398, 0
    %vm400 = vcmp.eq.s32.totalorder %v399, 1
    %402 = vrot.lane.b32.xlu0 %v397, 127
    %v403 = vpop.permute.xlu0 %402
    %v405 = vsel %vm400, %v390, %v403
    %v406 = vld [vmem:[%s2] sm:$0xff]
    %407 = vset.pattern.permute.xlu0 3
    %408 = vperm.xlu0 %407, %v34
    %v409 = vpop.permute.xlu0 %408
    %v412 = vsel %vm68, %v406, 0
    %414 = vmatpush.msra.mxu0 0.0
    %415 = vmatpush.msra.mxu0 0.0
    %416 = vmatpush.msra.mxu0 0.0
    %417 = vmatpush.msra.mxu0 0.0
    %418 = vmatpush.msra.mxu0 0.0
    %419 = vmatpush.msra.mxu0 0.0
    %420 = vmatpush.msra.mxu0 0.0
    %421 = vmatpush.msra.mxu0 0.0
    %422 = vmatpush.msra.mxu0 0.0
    %423 = vmatpush.msra.mxu0 0.0
    %424 = vmatpush.msra.mxu0 0.0
    %425 = vmatpush.msra.mxu0 0.0
    %426 = vmatpush.msra.mxu0 0.0
    %427 = vmatpush.msra.mxu0 0.0
    %428 = vmatpush.msra.mxu0 %v405
    %429 = vmatpush.msra.mxu0 %v322
    %430 = vmatmul.f32.gmra.mxu0 %v412
    %v431 = vpop.f32.mrf.mxu0
    %v432 = vadd.f32 %v409, %v431
    %433 = vdwg.mxu0
    %v435 = vsel %vm96, %v432, 0
    %437 = vmatpush.msra.mxu0 0.0
    %438 = vmatpush.msra.mxu0 0.0
    %439 = vmatpush.msra.mxu0 0.0
    %440 = vmatpush.msra.mxu0 0.0
    %441 = vmatpush.msra.mxu0 0.0
    %442 = vmatpush.msra.mxu0 0.0
    %443 = vmatpush.msra.mxu0 0.0
    %444 = vmatpush.msra.mxu0 0.0
    %445 = vmatpush.msra.mxu0 0.0
    %446 = vmatpush.msra.mxu0 0.0
    %447 = vmatpush.msra.mxu0 0.0
    %448 = vmatpush.msra.mxu0 0.0
    %449 = vmatpush.msra.mxu0 %v42
    %450 = vmatpush.msra.mxu0 %v41
    %451 = vmatpush.msra.mxu0 %v40
    %452 = vmatpush.msra.mxu0 %v39
    %453 = vmatmul.f32.gmra.mxu0 %v435
    %v454 = vpop.f32.mrf.mxu0
    %v455 = vadd.f32 0.0, %v454
    %456 = vdwg.mxu0
    %v457 = vmul.f32 %v432, %v432
    %v459 = vsel %vm96, %v457, 0
    %461 = vmatpush.msra.mxu0 0.0
    %462 = vmatpush.msra.mxu0 0.0
    %463 = vmatpush.msra.mxu0 0.0
    %464 = vmatpush.msra.mxu0 0.0
    %465 = vmatpush.msra.mxu0 0.0
    %466 = vmatpush.msra.mxu0 0.0
    %467 = vmatpush.msra.mxu0 0.0
    %468 = vmatpush.msra.mxu0 0.0
    %469 = vmatpush.msra.mxu0 0.0
    %470 = vmatpush.msra.mxu0 0.0
    %471 = vmatpush.msra.mxu0 0.0
    %472 = vmatpush.msra.mxu0 0.0
    %473 = vmatpush.msra.mxu0 %v42
    %474 = vmatpush.msra.mxu0 %v41
    %475 = vmatpush.msra.mxu0 %v40
    %476 = vmatpush.msra.mxu0 %v39
    %477 = vmatmul.f32.gmra.mxu0 %v459
    %v478 = vpop.f32.mrf.mxu0
    %v479 = vadd.f32 0.0, %v478
    %480 = vdwg.mxu0
    %v481 = vrcp.pop 16.0
    %v482 = vmul.f32 16.0, %v481
    %v483 = vsub.f32 1.0, %v482
    %v484 = vmul.f32 %v481, %v483
    %v485 = vadd.f32 %v481, %v484
    %vm486 = vweird.f32 %v481
    %v487 = vsel %vm486, %v481, %v485
    %v488 = vmul.f32 %v455, %v487
    %v489 = vmul.f32 %v479, %v487
    %v490 = vmul.f32 %v488, %v488
    %v491 = vsub.f32 %v489, %v490
    %v492 = vmax.f32 %v491, 0.0
    %v493 = vadd.f32 %v492, 1e-05
    %v494 = vrsqrt.pop %v493
    %v495 = vmul.f32 %v494, %v493
    %v496 = vmul.f32 %v495, %v494
    %v497 = vmul.f32 0.5, %v496
    %v498 = vsub.f32 1.5, %v497
    %v499 = vmul.f32 %v494, %v498
    %vm500 = vweird.f32 %v493
    %vm501 = vweird.f32 %v494
    %vm502 = vmor %vm500, %vm501
    %v503 = vsel %vm502, %v494, %v499
    %504 = vset.pattern.permute.xlu0 4
    %505 = vperm.xlu0 %504, %v34
    %v506 = vpop.permute.xlu0 %505
    %v508 = vmul.f32 %v506, %v503
    %v509 = vmul.f32 %v508, %v488
    %510 = vset.pattern.permute.xlu0 5
    %511 = vperm.xlu0 %510, %v34
    %v512 = vpop.permute.xlu0 %511
    %v514 = vsub.f32 %v512, %v509
    %v516 = vsel %vm226, %v508, 0
    %518 = vmatpush.msra.mxu0 0.0
    %519 = vmatpush.msra.mxu0 0.0
    %520 = vmatpush.msra.mxu0 0.0
    %521 = vmatpush.msra.mxu0 0.0
    %522 = vmatpush.msra.mxu0 0.0
    %523 = vmatpush.msra.mxu0 0.0
    %524 = vmatpush.msra.mxu0 0.0
    %525 = vmatpush.msra.mxu0 0.0
    %526 = vmatpush.msra.mxu0 0.0
    %527 = vmatpush.msra.mxu0 0.0
    %528 = vmatpush.msra.mxu0 0.0
    %529 = vmatpush.msra.mxu0 0.0
    %530 = vmatpush.msra.mxu0 0.0
    %531 = vmatpush.msra.mxu0 0.0
    %532 = vmatpush.msra.mxu0 0.0
    %533 = vmatpush.msra.mxu0 %v232
    %534 = vmatmul.f32.gmra.mxu0 %v516
    %v535 = vpop.f32.mrf.mxu0
    %v536 = vadd.f32 0.0, %v535
    %537 = vdwg.mxu0
    %v538 = vmul.f32 %v432, %v536
    %v540 = vsel %vm226, %v514, 0
    %542 = vmatpush.msra.mxu0 0.0
    %543 = vmatpush.msra.mxu0 0.0
    %544 = vmatpush.msra.mxu0 0.0
    %545 = vmatpush.msra.mxu0 0.0
    %546 = vmatpush.msra.mxu0 0.0
    %547 = vmatpush.msra.mxu0 0.0
    %548 = vmatpush.msra.mxu0 0.0
    %549 = vmatpush.msra.mxu0 0.0
    %550 = vmatpush.msra.mxu0 0.0
    %551 = vmatpush.msra.mxu0 0.0
    %552 = vmatpush.msra.mxu0 0.0
    %553 = vmatpush.msra.mxu0 0.0
    %554 = vmatpush.msra.mxu0 0.0
    %555 = vmatpush.msra.mxu0 0.0
    %556 = vmatpush.msra.mxu0 0.0
    %557 = vmatpush.msra.mxu0 %v232
    %558 = vmatmul.f32.gmra.mxu0 %v540
    %v559 = vpop.f32.mrf.mxu0
    %v560 = vadd.f32 0.0, %v559
    %561 = vdwg.mxu0
    %v562 = vadd.f32 %v538, %v560
    %v563 = vadd.f32 %v562, %v33
    %564 = vst.msk [vmem:[#allocation2] sm:$0xff] %vm96, %v563
    // Predicated region
    $region38: #{tpu_custom_call.1} parent=1 // pred_check
      _
    $region39: #{tpu_custom_call.1} parent=1 // pred_check_branch
      %566 = sbr.rel (0) target = $region41
    $region40: #{tpu_custom_call.1} parent=1 // pred_region
      %568 = vsyncadd [#allocation3], 0
      %s570 = sshll.u32 [#allocation2], 4
      %s571 = int_to_ptr.vmem [resolvable:$true] %s570
      %s572 = sshll.u32 %s9, 4
      %s573 = int_to_ptr.hbm [resolvable:$true] %s572
      %575 = dma.vmem_to_hbm [thread:$0]  %s571, 128, %s573, [#allocation3]
    $region41: #{tpu_custom_call.1} parent=1 // pred_fallthru
      _
    // Predicated region
    $region42: #{tpu_custom_call.1} parent=1 // pred_check
      _
    $region43: #{tpu_custom_call.1} parent=1 // pred_check_branch
      %577 = sbr.rel (0) target = $region45
    $region44: #{tpu_custom_call.1} parent=1 // pred_region
      %579 = dma.done [#allocation3], 128
    $region45: #{tpu_custom_call.1} parent=1 // pred_fallthru
      _
    %580 = vsyncpa [#allocation3], 1

// kernel: tpu_custom_call.1
$region0: #{tpu_custom_call.1}
  #allocation0 [shape = 'u32[]', space=smem, size = 0x4, offset = 0x4, fixed_abs, tag = 'smem constant byte address 0x4 - core index']
  #allocation1 [shape = 'u32[72,128]{1,0:T(1,128)}', space=vmem, size = 0x9000, scoped, tag = 'internal scratch']
  %s0 = inlined_call_operand.vmem [shape: f32[8,32], index: 0, kind: input, shape index: {}]
  %s1 = inlined_call_operand.vmem [shape: f32[8,16], index: 1, kind: input, shape index: {}]
  %s2 = inlined_call_operand.vmem [shape: f32[8,16], index: 2, kind: input, shape index: {}]
  %s3 = inlined_call_operand.vmem [shape: f32[8,8], index: 3, kind: input, shape index: {}]
  %s4 = inlined_call_operand.vmem [shape: f32[32,2], index: 4, kind: input, shape index: {}]
  %s5 = inlined_call_operand.vmem [shape: f32[2,32], index: 5, kind: input, shape index: {}]
  %s6 = inlined_call_operand.vmem [shape: f32[32,4], index: 6, kind: input, shape index: {}]
  %s7 = inlined_call_operand.vmem [shape: s32[1,32], index: 7, kind: input, shape index: {}]
  %s8 = inlined_call_operand.vmem [shape: s32[1,32], index: 8, kind: input, shape index: {}]
  %s9 = inlined_call_operand.hbm [shape: f32[8,32], index: 9, kind: output, shape index: {}]
  %s10 = sld [smem:[#allocation0]]
  $region46: #{tpu_custom_call.1} parent=0
    _
  %s12 = ssub.s32 1, %s10
  %s13 = scalar_select 0, %s12, %s10
  $region1: #{tpu_custom_call.1} parent=0
    #allocation2 [shape = 'u8[4096]{0}', space=vmem, size = 0x1000, scoped, tag = 'output window, operand 0, single buffered']
    #allocation3 [shape = 's32[1]{0}', space=sflag, size = 0x4, scoped, tag = 'scoped memory for tpu_custom_call.1']
    %14 = vsyncpa [#allocation3], 0
    // Predicated region
    $region2: #{tpu_custom_call.1} parent=1 // pred_check
      _
    $region3: #{tpu_custom_call.1} parent=1 // pred_check_branch
      %16 = sbr.rel (0) target = $region5
    $region4: #{tpu_custom_call.1} parent=1 // pred_region
      _
    $region5: #{tpu_custom_call.1} parent=1 // pred_fallthru
      _
    // Predicated region
    $region6: #{tpu_custom_call.1} parent=1 // pred_check
      _
    $region7: #{tpu_custom_call.1} parent=1 // pred_check_branch
      %18 = sbr.rel (0) target = $region9
    $region8: #{tpu_custom_call.1} parent=1 // pred_region
      _
    $region9: #{tpu_custom_call.1} parent=1 // pred_fallthru
      _
    // Predicated region
    $region10: #{tpu_custom_call.1} parent=1 // pred_check
      _
    $region11: #{tpu_custom_call.1} parent=1 // pred_check_branch
      %20 = sbr.rel (0) target = $region13
    $region12: #{tpu_custom_call.1} parent=1 // pred_region
      _
    $region13: #{tpu_custom_call.1} parent=1 // pred_fallthru
      _
    // Predicated region
    $region14: #{tpu_custom_call.1} parent=1 // pred_check
      _
    $region15: #{tpu_custom_call.1} parent=1 // pred_check_branch
      %22 = sbr.rel (0) target = $region17
    $region16: #{tpu_custom_call.1} parent=1 // pred_region
      _
    $region17: #{tpu_custom_call.1} parent=1 // pred_fallthru
      _
    // Predicated region
    $region18: #{tpu_custom_call.1} parent=1 // pred_check
      _
    $region19: #{tpu_custom_call.1} parent=1 // pred_check_branch
      %24 = sbr.rel (0) target = $region21
    $region20: #{tpu_custom_call.1} parent=1 // pred_region
      _
    $region21: #{tpu_custom_call.1} parent=1 // pred_fallthru
      _
    // Predicated region
    $region22: #{tpu_custom_call.1} parent=1 // pred_check
      _
    $region23: #{tpu_custom_call.1} parent=1 // pred_check_branch
      %26 = sbr.rel (0) target = $region25
    $region24: #{tpu_custom_call.1} parent=1 // pred_region
      _
    $region25: #{tpu_custom_call.1} parent=1 // pred_fallthru
      _
    // Predicated region
    $region26: #{tpu_custom_call.1} parent=1 // pred_check
      _
    $region27: #{tpu_custom_call.1} parent=1 // pred_check_branch
      %28 = sbr.rel (0) target = $region29
    $region28: #{tpu_custom_call.1} parent=1 // pred_region
      _
    $region29: #{tpu_custom_call.1} parent=1 // pred_fallthru
      _
    // Predicated region
    $region30: #{tpu_custom_call.1} parent=1 // pred_check
      _
    $region31: #{tpu_custom_call.1} parent=1 // pred_check_branch
      %30 = sbr.rel (0) target = $region33
    $region32: #{tpu_custom_call.1} parent=1 // pred_region
      _
    $region33: #{tpu_custom_call.1} parent=1 // pred_fallthru
      _
    // Predicated region
    $region34: #{tpu_custom_call.1} parent=1 // pred_check
      _
    $region35: #{tpu_custom_call.1} parent=1 // pred_check_branch
      %32 = sbr.rel (0) target = $region37
    $region36: #{tpu_custom_call.1} parent=1 // pred_region
      _
    $region37: #{tpu_custom_call.1} parent=1 // pred_fallthru
      _
    %v33 = vld [vmem:[%s0] sm:$0xff]
    %v34 = vld [vmem:[%s3] sm:$0xff]
    %v35 = vld [vmem:[%s7] sm:$0x1]
    %vm36 = vcmp.ne.s32.totalorder %v35, 0
    %v37 = vld [vmem:[%s8] sm:$0x1]
    %vm38 = vcmp.ne.s32.totalorder %v37, 0
    %v39 = vld [vmem:[%s4] sm:$0xff]
    %v40 = vld [vmem:[%s4 + $0x8] sm:$0xff]
    %v41 = vld [vmem:[%s4 + $0x10] sm:$0xff]
    %v42 = vld [vmem:[%s4 + $0x18] sm:$0xff]
    %v43 = vld [vmem:[%s5] sm:$0x3]
    %vm44 = vcmask 1047808
    %45 = vrot.lane.b32.xlu0 %v33, 32
    %v46 = vpop.permute.xlu0 %45
    %v47 = vsel %vm44, %v46, %v33
    %48 = vrot.lane.b32.xlu0 %v47, 32
    %v49 = vpop.permute.xlu0 %48
    %v50 = vsel %vm44, %v49, %v33
    %v51 = vsel %vm36, 1, 0
    %v52 = vperm.slane %v51, 0
    %vm53 = vcmp.eq.s32.totalorder %v52, 1
    %55 = vrot.lane.b32.xlu0 %v50, 127
    %v56 = vpop.permute.xlu0 %55
    %58 = vrot.lane.b32.xlu0 %v50, 97
    %v59 = vpop.permute.xlu0 %58
    %v61 = vsel %vm53, %v56, %v59
    %v62 = vld [vmem:[%s1] sm:$0xff]
    %64 = vset.pattern.permute.xlu0 0
    %65 = vperm.xlu0 %64, %v34
    %v66 = vpop.permute.xlu0 %65
    %vm68 = vcmask 130048
    %v70 = vsel %vm68, %v62, 0
    %72 = vmatpush.msra.mxu0 0.0
    %73 = vmatpush.msra.mxu0 0.0
    %74 = vmatpush.msra.mxu0 0.0
    %75 = vmatpush.msra.mxu0 0.0
    %76 = vmatpush.msra.mxu0 0.0
    %77 = vmatpush.msra.mxu0 0.0
    %78 = vmatpush.msra.mxu0 0.0
    %79 = vmatpush.msra.mxu0 0.0
    %80 = vmatpush.msra.mxu0 0.0
    %81 = vmatpush.msra.mxu0 0.0
    %82 = vmatpush.msra.mxu0 0.0
    %83 = vmatpush.msra.mxu0 0.0
    %84 = vmatpush.msra.mxu0 0.0
    %85 = vmatpush.msra.mxu0 0.0
    %86 = vmatpush.msra.mxu0 %v33
    %87 = vmatpush.msra.mxu0 %v61
    %88 = vmatmul.f32.gmra.mxu0 %v70
    %v89 = vpop.f32.mrf.mxu0
    %v90 = vadd.f32 %v66, %v89
    %91 = vdwg.mxu0
    %v92 = vld [vmem:[%s6] sm:$0xff]
    %v93 = vld [vmem:[%s6 + $0x8] sm:$0xff]
    %v94 = vld [vmem:[%s6 + $0x10] sm:$0xff]
    %v95 = vld [vmem:[%s6 + $0x18] sm:$0xff]
    %vm96 = vcmask 261120
    %v98 = vsel %vm96, %v33, 0
    %100 = vmatpush.msra.mxu0 0.0
    %101 = vmatpush.msra.mxu0 0.0
    %102 = vmatpush.msra.mxu0 0.0
    %103 = vmatpush.msra.mxu0 0.0
    %104 = vmatpush.msra.mxu0 0.0
    %105 = vmatpush.msra.mxu0 0.0
    %106 = vmatpush.msra.mxu0 0.0
    %107 = vmatpush.msra.mxu0 0.0
    %108 = vmatpush.msra.mxu0 0.0
    %109 = vmatpush.msra.mxu0 0.0
    %110 = vmatpush.msra.mxu0 0.0
    %111 = vmatpush.msra.mxu0 0.0
    %112 = vmatpush.msra.mxu0 %v95
    %113 = vmatpush.msra.mxu0 %v94
    %114 = vmatpush.msra.mxu0 %v93
    %115 = vmatpush.msra.mxu0 %v92
    %116 = vmatmul.f32.gmra.mxu0 %v98
    %v117 = vpop.f32.mrf.mxu0
    %v118 = vadd.f32 0.0, %v117
    %119 = vdwg.mxu0
    %121 = vrot.lane.b32.xlu0 %v118, 126
    %v122 = vpop.permute.xlu0 %121
    %124 = vmatpush.msra.mxu0 0.0
    %125 = vmatpush.msra.mxu0 0.0
    %126 = vmatpush.msra.mxu0 0.0
    %127 = vmatpush.msra.mxu0 0.0
    %128 = vmatpush.msra.mxu0 0.0
    %129 = vmatpush.msra.mxu0 0.0
    %130 = vmatpush.msra.mxu0 0.0
    %131 = vmatpush.msra.mxu0 0.0
    %132 = vmatpush.msra.mxu0 0.0
    %133 = vmatpush.msra.mxu0 0.0
    %134 = vmatpush.msra.mxu0 0.0
    %135 = vmatpush.msra.mxu0 0.0
    %136 = vmatpush.msra.mxu0 0.0
    %137 = vmatpush.msra.mxu0 0.0
    %138 = vmatpush.msra.mxu0 %v122
    %139 = vmatpush.msra.mxu0 %v118
    %140 = vmatmul.f32.gmra.mxu0 %v70
    %v141 = vpop.f32.mrf.mxu0
    %v142 = vadd.f32 %v66, %v141
    %143 = vdwg.mxu0
    %v145 = vsel %vm96, %v90, 0
    %147 = vmatpush.msra.mxu0 0.0
    %148 = vmatpush.msra.mxu0 0.0
    %149 = vmatpush.msra.mxu0 0.0
    %150 = vmatpush.msra.mxu0 0.0
    %151 = vmatpush.msra.mxu0 0.0
    %152 = vmatpush.msra.mxu0 0.0
    %153 = vmatpush.msra.mxu0 0.0
    %154 = vmatpush.msra.mxu0 0.0
    %155 = vmatpush.msra.mxu0 0.0
    %156 = vmatpush.msra.mxu0 0.0
    %157 = vmatpush.msra.mxu0 0.0
    %158 = vmatpush.msra.mxu0 0.0
    %159 = vmatpush.msra.mxu0 %v42
    %160 = vmatpush.msra.mxu0 %v41
    %161 = vmatpush.msra.mxu0 %v40
    %162 = vmatpush.msra.mxu0 %v39
    %163 = vmatmul.f32.gmra.mxu0 %v145
    %v164 = vpop.f32.mrf.mxu0
    %v165 = vadd.f32 %v142, %v164
    %166 = vdwg.mxu0
    %v167 = vmul.f32 %v90, %v90
    %v168 = vmul.f32 %v142, %v142
    %v170 = vsel %vm96, %v167, 0
    %172 = vmatpush.msra.mxu0 0.0
    %173 = vmatpush.msra.mxu0 0.0
    %174 = vmatpush.msra.mxu0 0.0
    %175 = vmatpush.msra.mxu0 0.0
    %176 = vmatpush.msra.mxu0 0.0
    %177 = vmatpush.msra.mxu0 0.0
    %178 = vmatpush.msra.mxu0 0.0
    %179 = vmatpush.msra.mxu0 0.0
    %180 = vmatpush.msra.mxu0 0.0
    %181 = vmatpush.msra.mxu0 0.0
    %182 = vmatpush.msra.mxu0 0.0
    %183 = vmatpush.msra.mxu0 0.0
    %184 = vmatpush.msra.mxu0 %v42
    %185 = vmatpush.msra.mxu0 %v41
    %186 = vmatpush.msra.mxu0 %v40
    %187 = vmatpush.msra.mxu0 %v39
    %188 = vmatmul.f32.gmra.mxu0 %v170
    %v189 = vpop.f32.mrf.mxu0
    %v190 = vadd.f32 %v168, %v189
    %191 = vdwg.mxu0
    %v192 = vrcp.pop 17.0
    %v193 = vmul.f32 17.0, %v192
    %v194 = vsub.f32 1.0, %v193
    %v195 = vmul.f32 %v192, %v194
    %v196 = vadd.f32 %v192, %v195
    %vm197 = vweird.f32 %v192
    %v198 = vsel %vm197, %v192, %v196
    %v199 = vmul.f32 %v165, %v198
    %v200 = vmul.f32 %v190, %v198
    %v201 = vmul.f32 %v199, %v199
    %v202 = vsub.f32 %v200, %v201
    %v203 = vmax.f32 %v202, 0.0
    %v204 = vadd.f32 %v203, 1e-05
    %v205 = vrsqrt.pop %v204
    %v206 = vmul.f32 %v205, %v204
    %v207 = vmul.f32 %v206, %v205
    %v208 = vmul.f32 0.5, %v207
    %v209 = vsub.f32 1.5, %v208
    %v210 = vmul.f32 %v205, %v209
    %vm211 = vweird.f32 %v204
    %vm212 = vweird.f32 %v205
    %vm213 = vmor %vm211, %vm212
    %v214 = vsel %vm213, %v205, %v210
    %215 = vset.pattern.permute.xlu0 1
    %216 = vperm.xlu0 %215, %v34
    %v217 = vpop.permute.xlu0 %216
    %v219 = vmul.f32 %v217, %v214
    %v220 = vmul.f32 %v219, %v199
    %221 = vset.pattern.permute.xlu0 2
    %222 = vperm.xlu0 %221, %v34
    %v223 = vpop.permute.xlu0 %222
    %v225 = vsub.f32 %v223, %v220
    %vm226 = vcmask 15360
    %v228 = vsel %vm226, %v219, 0
    %vm230 = vcmask 1041408
    %v232 = vsel %vm230, %v43, 0
    %234 = vmatpush.msra.mxu0 0.0
    %235 = vmatpush.msra.mxu0 0.0
    %236 = vmatpush.msra.mxu0 0.0
    %237 = vmatpush.msra.mxu0 0.0
    %238 = vmatpush.msra.mxu0 0.0
    %239 = vmatpush.msra.mxu0 0.0
    %240 = vmatpush.msra.mxu0 0.0
    %241 = vmatpush.msra.mxu0 0.0
    %242 = vmatpush.msra.mxu0 0.0
    %243 = vmatpush.msra.mxu0 0.0
    %244 = vmatpush.msra.mxu0 0.0
    %245 = vmatpush.msra.mxu0 0.0
    %246 = vmatpush.msra.mxu0 0.0
    %247 = vmatpush.msra.mxu0 0.0
    %248 = vmatpush.msra.mxu0 0.0
    %249 = vmatpush.msra.mxu0 %v232
    %250 = vmatmul.f32.gmra.mxu0 %v228
    %v251 = vpop.f32.mrf.mxu0
    %v252 = vadd.f32 0.0, %v251
    %253 = vdwg.mxu0
    %v254 = vmul.f32 %v90, %v252
    %v256 = vsel %vm226, %v225, 0
    %258 = vmatpush.msra.mxu0 0.0
    %259 = vmatpush.msra.mxu0 0.0
    %260 = vmatpush.msra.mxu0 0.0
    %261 = vmatpush.msra.mxu0 0.0
    %262 = vmatpush.msra.mxu0 0.0
    %263 = vmatpush.msra.mxu0 0.0
    %264 = vmatpush.msra.mxu0 0.0
    %265 = vmatpush.msra.mxu0 0.0
    %266 = vmatpush.msra.mxu0 0.0
    %267 = vmatpush.msra.mxu0 0.0
    %268 = vmatpush.msra.mxu0 0.0
    %269 = vmatpush.msra.mxu0 0.0
    %270 = vmatpush.msra.mxu0 0.0
    %271 = vmatpush.msra.mxu0 0.0
    %272 = vmatpush.msra.mxu0 0.0
    %273 = vmatpush.msra.mxu0 %v232
    %274 = vmatmul.f32.gmra.mxu0 %v256
    %v275 = vpop.f32.mrf.mxu0
    %v276 = vadd.f32 0.0, %v275
    %277 = vdwg.mxu0
    %v278 = vadd.f32 %v254, %v276
    %v279 = vmul.f32 %v278, 0.5
    %v280 = vmul.f32 %v278, 0.70710677
    %v281 = vmul.f32 %v280, %v280
    %v282 = vmin.f32 16.0, %v281
    %v283 = vmul.f32 %v282, 2.1237322e-06
    %v284 = vadd.f32 %v283, 0.00028619796
    %v285 = vmul.f32 %v282, %v284
    %v286 = vadd.f32 %v285, 0.0036580483
    %v287 = vmul.f32 %v282, %v286
    %v288 = vadd.f32 %v287, 0.05243302
    %v289 = vmul.f32 %v282, %v288
    %v290 = vadd.f32 %v289, 0.18741608
    %v291 = vmul.f32 %v282, %v290
    %v292 = vadd.f32 %v291, 1.1283791
    %v293 = vmul.f32 %v280, %v292
    %v294 = vmul.f32 %v282, 3.8918573e-05
    %v295 = vadd.f32 %v294, 0.001143296
    %v296 = vmul.f32 %v282, %v295
    %v297 = vadd.f32 %v296, 0.014752088
    %v298 = vmul.f32 %v282, %v297
    %v299 = vadd.f32 %v298, 0.112945676
    %v300 = vmul.f32 %v282, %v299
    %v301 = vadd.f32 %v300, 0.4994258
    %v302 = vmul.f32 %v282, %v301
    %v303 = vadd.f32 %v302, 1.0
    %v304 = vrcp.pop %v303
    %v305 = vmul.f32 %v303, %v304
    %v306 = vsub.f32 1.0, %v305
    %v307 = vmul.f32 %v304, %v306
    %v308 = vadd.f32 %v304, %v307
    %vm309 = vweird.f32 %v303
    %vm310 = vweird.f32 %v304
    %vm311 = vmor %vm309, %vm310
    %v312 = vsel %vm311, %v304, %v308
    %v313 = vand.u32 2147483647, %v303
    %vm314 = vcmp.eq.f32.partialorder %v313, 8.507059e+37
    %v315 = vand.u32 %v303, 2147483648
    %v316 = vor.u32 1.1754944e-38, %v315
    %v317 = vsel %vm314, %v316, %v312
    %v318 = vmul.f32 %v293, %v317
    %v319 = vmin.f32 %v318, 1.0
    %v320 = vmax.f32 %v319, -1.0
    %v321 = vadd.f32 %v320, 1.0
    %v322 = vmul.f32 %v279, %v321
    %v323 = vmul.f32 %v142, %v219
    %v324 = vadd.f32 %v323, %v225
    %v325 = vmul.f32 %v324, 0.5
    %v326 = vmul.f32 %v324, 0.70710677
    %v327 = vmul.f32 %v326, %v326
    %v328 = vmin.f32 16.0, %v327
    %v329 = vmul.f32 %v328, 2.1237322e-06
    %v330 = vadd.f32 %v329, 0.00028619796
    %v331 = vmul.f32 %v328, %v330
    %v332 = vadd.f32 %v331, 0.0036580483
    %v333 = vmul.f32 %v328, %v332
    %v334 = vadd.f32 %v333, 0.05243302
    %v335 = vmul.f32 %v328, %v334
    %v336 = vadd.f32 %v335, 0.18741608
    %v337 = vmul.f32 %v328, %v336
    %v338 = vadd.f32 %v337, 1.1283791
    %v339 = vmul.f32 %v326, %v338
    %v340 = vmul.f32 %v328, 3.8918573e-05
    %v341 = vadd.f32 %v340, 0.001143296
    %v342 = vmul.f32 %v328, %v341
    %v343 = vadd.f32 %v342, 0.014752088
    %v344 = vmul.f32 %v328, %v343
    %v345 = vadd.f32 %v344, 0.112945676
    %v346 = vmul.f32 %v328, %v345
    %v347 = vadd.f32 %v346, 0.4994258
    %v348 = vmul.f32 %v328, %v347
    %v349 = vadd.f32 %v348, 1.0
    %v350 = vrcp.pop %v349
    %v351 = vmul.f32 %v349, %v350
    %v352 = vsub.f32 1.0, %v351
    %v353 = vmul.f32 %v350, %v352
    %v354 = vadd.f32 %v350, %v353
    %vm355 = vweird.f32 %v349
    %vm356 = vweird.f32 %v350
    %vm357 = vmor %vm355, %vm356
    %v358 = vsel %vm357, %v350, %v354
    %v359 = vand.u32 2147483647, %v349
    %vm360 = vcmp.eq.f32.partialorder %v359, 8.507059e+37
    %v361 = vand.u32 %v349, 2147483648
    %v362 = vor.u32 1.1754944e-38, %v361
    %v363 = vsel %vm360, %v362, %v358
    %v364 = vmul.f32 %v339, %v363
    %v365 = vmin.f32 %v364, 1.0
    %v366 = vmax.f32 %v365, -1.0
    %v367 = vadd.f32 %v366, 1.0
    %v368 = vmul.f32 %v325, %v367
    %v370 = vsel %vm226, %v368, 0
    %372 = vmatpush.msra.mxu0 0.0
    %373 = vmatpush.msra.mxu0 0.0
    %374 = vmatpush.msra.mxu0 0.0
    %375 = vmatpush.msra.mxu0 0.0
    %376 = vmatpush.msra.mxu0 0.0
    %377 = vmatpush.msra.mxu0 0.0
    %378 = vmatpush.msra.mxu0 0.0
    %379 = vmatpush.msra.mxu0 0.0
    %380 = vmatpush.msra.mxu0 0.0
    %381 = vmatpush.msra.mxu0 0.0
    %382 = vmatpush.msra.mxu0 0.0
    %383 = vmatpush.msra.mxu0 0.0
    %384 = vmatpush.msra.mxu0 0.0
    %385 = vmatpush.msra.mxu0 0.0
    %386 = vmatpush.msra.mxu0 0.0
    %387 = vmatpush.msra.mxu0 %v232
    %388 = vmatmul.f32.gmra.mxu0 %v370
    %v389 = vpop.f32.mrf.mxu0
    %v390 = vadd.f32 0.0, %v389
    %391 = vdwg.mxu0
    %392 = vrot.lane.b32.xlu0 %v322, 32
    %v393 = vpop.permute.xlu0 %392
    %v394 = vsel %vm44, %v393, %v322
    %395 = vrot.lane.b32.xlu0 %v394, 32
    %v396 = vpop.permute.xlu0 %395
    %v397 = vsel %vm44, %v396, %v322
    %v398 = vsel %vm38, 1, 0
    %v399 = vperm.slane %v398, 0
    %vm400 = vcmp.eq.s32.totalorder %v399, 1
    %402 = vrot.lane.b32.xlu0 %v397, 127
    %v403 = vpop.permute.xlu0 %402
    %v405 = vsel %vm400, %v390, %v403
    %v406 = vld [vmem:[%s2] sm:$0xff]
    %407 = vset.pattern.permute.xlu0 3
    %408 = vperm.xlu0 %407, %v34
    %v409 = vpop.permute.xlu0 %408
    %v412 = vsel %vm68, %v406, 0
    %414 = vmatpush.msra.mxu0 0.0
    %415 = vmatpush.msra.mxu0 0.0
    %416 = vmatpush.msra.mxu0 0.0
    %417 = vmatpush.msra.mxu0 0.0
    %418 = vmatpush.msra.mxu0 0.0
    %419 = vmatpush.msra.mxu0 0.0
    %420 = vmatpush.msra.mxu0 0.0
    %421 = vmatpush.msra.mxu0 0.0
    %422 = vmatpush.msra.mxu0 0.0
    %423 = vmatpush.msra.mxu0 0.0
    %424 = vmatpush.msra.mxu0 0.0
    %425 = vmatpush.msra.mxu0 0.0
    %426 = vmatpush.msra.mxu0 0.0
    %427 = vmatpush.msra.mxu0 0.0
    %428 = vmatpush.msra.mxu0 %v405
    %429 = vmatpush.msra.mxu0 %v322
    %430 = vmatmul.f32.gmra.mxu0 %v412
    %v431 = vpop.f32.mrf.mxu0
    %v432 = vadd.f32 %v409, %v431
    %433 = vdwg.mxu0
    %v435 = vsel %vm96, %v432, 0
    %437 = vmatpush.msra.mxu0 0.0
    %438 = vmatpush.msra.mxu0 0.0
    %439 = vmatpush.msra.mxu0 0.0
    %440 = vmatpush.msra.mxu0 0.0
    %441 = vmatpush.msra.mxu0 0.0
    %442 = vmatpush.msra.mxu0 0.0
    %443 = vmatpush.msra.mxu0 0.0
    %444 = vmatpush.msra.mxu0 0.0
    %445 = vmatpush.msra.mxu0 0.0
    %446 = vmatpush.msra.mxu0 0.0
    %447 = vmatpush.msra.mxu0 0.0
    %448 = vmatpush.msra.mxu0 0.0
    %449 = vmatpush.msra.mxu0 %v42
    %450 = vmatpush.msra.mxu0 %v41
    %451 = vmatpush.msra.mxu0 %v40
    %452 = vmatpush.msra.mxu0 %v39
    %453 = vmatmul.f32.gmra.mxu0 %v435
    %v454 = vpop.f32.mrf.mxu0
    %v455 = vadd.f32 0.0, %v454
    %456 = vdwg.mxu0
    %v457 = vmul.f32 %v432, %v432
    %v459 = vsel %vm96, %v457, 0
    %461 = vmatpush.msra.mxu0 0.0
    %462 = vmatpush.msra.mxu0 0.0
    %463 = vmatpush.msra.mxu0 0.0
    %464 = vmatpush.msra.mxu0 0.0
    %465 = vmatpush.msra.mxu0 0.0
    %466 = vmatpush.msra.mxu0 0.0
    %467 = vmatpush.msra.mxu0 0.0
    %468 = vmatpush.msra.mxu0 0.0
    %469 = vmatpush.msra.mxu0 0.0
    %470 = vmatpush.msra.mxu0 0.0
    %471 = vmatpush.msra.mxu0 0.0
    %472 = vmatpush.msra.mxu0 0.0
    %473 = vmatpush.msra.mxu0 %v42
    %474 = vmatpush.msra.mxu0 %v41
    %475 = vmatpush.msra.mxu0 %v40
    %476 = vmatpush.msra.mxu0 %v39
    %477 = vmatmul.f32.gmra.mxu0 %v459
    %v478 = vpop.f32.mrf.mxu0
    %v479 = vadd.f32 0.0, %v478
    %480 = vdwg.mxu0
    %v481 = vrcp.pop 16.0
    %v482 = vmul.f32 16.0, %v481
    %v483 = vsub.f32 1.0, %v482
    %v484 = vmul.f32 %v481, %v483
    %v485 = vadd.f32 %v481, %v484
    %vm486 = vweird.f32 %v481
    %v487 = vsel %vm486, %v481, %v485
    %v488 = vmul.f32 %v455, %v487
    %v489 = vmul.f32 %v479, %v487
    %v490 = vmul.f32 %v488, %v488
    %v491 = vsub.f32 %v489, %v490
    %v492 = vmax.f32 %v491, 0.0
    %v493 = vadd.f32 %v492, 1e-05
    %v494 = vrsqrt.pop %v493
    %v495 = vmul.f32 %v494, %v493
    %v496 = vmul.f32 %v495, %v494
    %v497 = vmul.f32 0.5, %v496
    %v498 = vsub.f32 1.5, %v497
    %v499 = vmul.f32 %v494, %v498
    %vm500 = vweird.f32 %v493
    %vm501 = vweird.f32 %v494
    %vm502 = vmor %vm500, %vm501
    %v503 = vsel %vm502, %v494, %v499
    %504 = vset.pattern.permute.xlu0 4
    %505 = vperm.xlu0 %504, %v34
    %v506 = vpop.permute.xlu0 %505
    %v508 = vmul.f32 %v506, %v503
    %v509 = vmul.f32 %v508, %v488
    %510 = vset.pattern.permute.xlu0 5
    %511 = vperm.xlu0 %510, %v34
    %v512 = vpop.permute.xlu0 %511
    %v514 = vsub.f32 %v512, %v509
    %v516 = vsel %vm226, %v508, 0
    %518 = vmatpush.msra.mxu0 0.0
    %519 = vmatpush.msra.mxu0 0.0
    %520 = vmatpush.msra.mxu0 0.0
    %521 = vmatpush.msra.mxu0 0.0
    %522 = vmatpush.msra.mxu0 0.0
    %523 = vmatpush.msra.mxu0 0.0
    %524 = vmatpush.msra.mxu0 0.0
    %525 = vmatpush.msra.mxu0 0.0
    %526 = vmatpush.msra.mxu0 0.0
    %527 = vmatpush.msra.mxu0 0.0
    %528 = vmatpush.msra.mxu0 0.0
    %529 = vmatpush.msra.mxu0 0.0
    %530 = vmatpush.msra.mxu0 0.0
    %531 = vmatpush.msra.mxu0 0.0
    %532 = vmatpush.msra.mxu0 0.0
    %533 = vmatpush.msra.mxu0 %v232
    %534 = vmatmul.f32.gmra.mxu0 %v516
    %v535 = vpop.f32.mrf.mxu0
    %v536 = vadd.f32 0.0, %v535
    %537 = vdwg.mxu0
    %v538 = vmul.f32 %v432, %v536
    %v540 = vsel %vm226, %v514, 0
    %542 = vmatpush.msra.mxu0 0.0
    %543 = vmatpush.msra.mxu0 0.0
    %544 = vmatpush.msra.mxu0 0.0
    %545 = vmatpush.msra.mxu0 0.0
    %546 = vmatpush.msra.mxu0 0.0
    %547 = vmatpush.msra.mxu0 0.0
    %548 = vmatpush.msra.mxu0 0.0
    %549 = vmatpush.msra.mxu0 0.0
    %550 = vmatpush.msra.mxu0 0.0
    %551 = vmatpush.msra.mxu0 0.0
    %552 = vmatpush.msra.mxu0 0.0
    %553 = vmatpush.msra.mxu0 0.0
    %554 = vmatpush.msra.mxu0 0.0
    %555 = vmatpush.msra.mxu0 0.0
    %556 = vmatpush.msra.mxu0 0.0
    %557 = vmatpush.msra.mxu0 %v232
    %558 = vmatmul.f32.gmra.mxu0 %v540
    %v559 = vpop.f32.mrf.mxu0
    %v560 = vadd.f32 0.0, %v559
    %561 = vdwg.mxu0
    %v562 = vadd.f32 %v538, %v560
    %v563 = vadd.f32 %v562, %v33
    %564 = vst.msk [vmem:[#allocation2] sm:$0xff] %vm96, %v563
    // Predicated region
    $region38: #{tpu_custom_call.1} parent=1 // pred_check
      _
    $region39: #{tpu_custom_call.1} parent=1 // pred_check_branch
      %566 = sbr.rel (0) target = $region41
    $region40: #{tpu_custom_call.1} parent=1 // pred_region
      %568 = vsyncadd [#allocation3], 0
      %s570 = sshll.u32 [#allocation2], 4
      %s571 = int_to_ptr.vmem [resolvable:$true] %s570
      %s572 = sshll.u32 %s9, 4
      %s573 = int_to_ptr.hbm [resolvable:$true] %s572
      %575 = dma.vmem_to_hbm [thread:$0]  %s571, 128, %s573, [#allocation3]
    $region41: #{tpu_custom_call.1} parent=1 // pred_fallthru
      _
    // Predicated region
    $region42: #{tpu_custom_call.1} parent=1 // pred_check
      _
    $region43: #{tpu_custom_call.1} parent=1 // pred_check_branch
      %577 = sbr.rel (0) target = $region45
    $region44: #{tpu_custom_call.1} parent=1 // pred_region
      %579 = dma.done [#allocation3], 128
    $region45: #{tpu_custom_call.1} parent=1 // pred_fallthru
      _
    %580 = vsyncpa [#allocation3], 1

</llo_original>
